<compile_context>
chip_gen: v5e
topology: v5e:2x2
jax: 0.10.0
libtpu: 0.0.40
codegen_flags: <defaults>
</compile_context>

<pallas_src>
import math

import jax
import jax.numpy as jnp
from jax import lax
from jax.experimental import pallas as pl
from jax.experimental.pallas import tpu as pltpu

HIDDEN = 32          # hidden_size (embed_dim)
HEADS = 8            # num_heads
HEAD_DIM = HIDDEN // HEADS
FC_HIDDEN = 128      # attention_fc inner width


def _mha_pool_kernel(x_ref, mask_ref,
                     wqkv_ref, bqkv_ref, wo_ref, bo_ref,
                     w1_ref, b1_ref, w2_ref, b2_ref,
                     pooled_ref, weights_ref):
    TB, L, E = x_ref.shape
    H, dh = HEADS, HEAD_DIM
    R = TB * L

    x = x_ref[...]                               # (TB, L, E)
    mask = mask_ref[...]                         # (TB, L), 1.0 = valid token

    # ---- fused QKV projection: ONE lane-dense (TB*L, 32) @ (32, 96) matmul ----------
    qkv = jnp.dot(x.reshape(R, E), wqkv_ref[...],
                  preferred_element_type=jnp.float32) + bqkv_ref[...]       # (R, 96)
    qkv = qkv.reshape(TB, L, 3 * E)
    q = qkv[:, :, 0:E]                           # (TB, L, E)
    k = qkv[:, :, E:2 * E]
    v = qkv[:, :, 2 * E:3 * E]

    # ---- per-head scaled dot-product attention ---------------------------------------
    # Head h owns channels [h*dh, (h+1)*dh).  Masking q (for QK^T) and v (for P@V) with a
    # static channel mask gives exactly the per-head results while every matmul stays a
    # full 32-deep / 32-lane MXU pass; no head reshapes, transposes or replication.
    scale = 1.0 / math.sqrt(dh)
    key_bias = jnp.where(mask[:, None, :] > 0.5, 0.0, -1e30)                # (TB, 1, L)
    ch = lax.broadcasted_iota(jnp.int32, (1, 1, E), 2)                      # channel ids

    o = jnp.zeros((TB, L, E), jnp.float32)
    for h in range(H):
        in_head = (ch >= h * dh) & (ch < (h + 1) * dh)                      # static (1,1,E)
        qh = jnp.where(in_head, q, 0.0)          # masking one QK^T operand is sufficient
        vh = jnp.where(in_head, v, 0.0)          # masks head h's output channels of P@V
        s = jnp.einsum('tle,tme->tlm', qh, k,
                       preferred_element_type=jnp.float32) * scale + key_bias
        s = s - jnp.max(s, axis=-1, keepdims=True)
        p = jnp.exp(s)
        p = p * pl.reciprocal(jnp.sum(p, axis=-1, keepdims=True), approx=True)
        o = o + jnp.einsum('tlm,tme->tle', p, vh,
                           preferred_element_type=jnp.float32)              # (TB, L, E)

    # ---- output projection: ONE (TB*L, 32) @ (32, 32) matmul -------------------------
    attn2 = jnp.dot(o.reshape(R, E), wo_ref[...],
                    preferred_element_type=jnp.float32) + bo_ref[...]       # (R, E)

    # ---- gating MLP on the flattened (TB*L, 32) slab ---------------------------------
    h1 = jnp.tanh(jnp.dot(attn2, w1_ref[...],
                          preferred_element_type=jnp.float32) + b1_ref[...])  # (R, 128)
    # 128 -> 1 projection as multiply + lane reduction: result is lane-dense (TB, L).
    z = jnp.sum(h1.reshape(TB, L, FC_HIDDEN) * w2_ref[...], axis=-1)        # (TB, L)
    z = z + b2_ref[0, 0]                                                    # SMEM scalar
    wts = pl.reciprocal(1.0 + jnp.exp(-z), approx=True)                     # sigmoid (EUP)

    # ---- mask, normalize over the sequence axis, weighted-sum pool -------------------
    wts = wts * mask                                                        # (TB, L)
    denom = jnp.sum(wts, axis=-1, keepdims=True) + 1e-9                     # (TB, 1)
    wts = wts * pl.reciprocal(denom, approx=True)

    attn = attn2.reshape(TB, L, E)
    pooled3 = jnp.einsum('tql,tle->tqe', wts[:, None, :], attn,
                         preferred_element_type=jnp.float32)                # (TB, 1, E)
    pooled_ref[...] = pooled3.reshape(TB, E)                                # dense store
    weights_ref[...] = wts                                                  # dense store


def _pack_params(params):
    """Pack math-layout params (y = x @ W + b) into a fused [Wq|Wk|Wv] weight / bias."""
    wq, bq, wk, bk, wv, bv, wo, bo, w1, b1, w2, b2 = params
    wqkv = jnp.concatenate([wq, wk, wv], axis=1)   # (E, 3E) = (32, 96)
    bqkv = jnp.concatenate([bq, bk, bv], axis=1)   # (1, 3E)
    return wqkv, bqkv, wo, bo, w1, b1, w2, b2


def _pick_block_batch(B, L):
    """Block-batch TB: fill ~256 matmul rows (TB*L) per grid step, stay within a ~4 MiB
    per-step f32 activation budget, and leave >= 4 grid steps when B is large enough
    (v7x: two TensorCores + double-buffering). Small B folds entirely into one step."""
    per_tb_bytes = 4 * L * (3 * HIDDEN + 4 * HIDDEN + 2 * L + FC_HIDDEN)
    vmem_cap = max(1, (4 << 20) // per_tb_bytes)
    rows_cap = max(1, -(-256 // L))                  # ceil(256 / L)
    tb = max(1, min(B, vmem_cap, rows_cap))
    if B // tb < 4:                                  # try to keep >= 4 grid steps ...
        tb_alt = max(1, B // 4)
        if tb_alt * L >= 128:                        # ... but never below ~128 rows/step
            tb = min(tb, tb_alt)
    return tb


def multi_head_attention_pooling(hidden_states, attention_mask, params, tb=None):
    """params = (wq, bq, wk, bk, wv, bv, wo, bo, w1, b1, w2, b2); weights pre-transposed
    so y = x @ W + b, except w2 which keeps PyTorch's (1, 128) layout; b2 is (1, 1)."""
    B, L, E = hidden_states.shape
    assert E == HIDDEN
    if tb is None:
        tb = _pick_block_batch(B, L)
    tb = max(1, min(tb, B))
    if tb < B and tb % 8 != 0:
        # Multi-step grids use a sublane-aligned batch block.
        tb = min(B, ((tb + 7) // 8) * 8)
    Bp = ((B + tb - 1) // tb) * tb                   # pad B up to a multiple of tb

    x = hidden_states.astype(jnp.float32)
    mask2 = attention_mask.astype(jnp.float32).reshape(B, L)
    if Bp != B:
        pad = Bp - B
        x = jnp.pad(x, ((0, pad), (0, 0), (0, 0)))
        mask2 = jnp.pad(mask2, ((0, pad), (0, 0)))   # padded rows are fully masked

    wqkv, bqkv, wo, bo, w1, b1, w2, b2 = _pack_params(params)

    def rep(a):
        return pl.BlockSpec(a.shape, lambda b, nd=a.ndim: (0,) * nd)

    grid = (Bp // tb,)
    in_specs = [
        pl.BlockSpec((tb, L, E), lambda b: (b, 0, 0)),          # hidden_states block
        pl.BlockSpec((tb, L), lambda b: (b, 0)),                # mask block (dense)
        rep(wqkv), rep(bqkv),                                   # fused QKV weight / bias
        rep(wo), rep(bo),                                       # output projection
        rep(w1), rep(b1), rep(w2),                              # gating MLP
        pl.BlockSpec(memory_space=pltpu.MemorySpace.SMEM),      # b2 scalar in SMEM
    ]
    out_specs = (
        pl.BlockSpec((tb, E), lambda b: (b, 0)),                # pooled, sublane/lane dense
        pl.BlockSpec((tb, L), lambda b: (b, 0)),                # weights, sublane/lane dense
    )
    out_shapes = (
        jax.ShapeDtypeStruct((Bp, E), jnp.float32),
        jax.ShapeDtypeStruct((Bp, L), jnp.float32),
    )

    pooled, w2d = pl.pallas_call(
        _mha_pool_kernel,
        out_shape=out_shapes,
        grid=grid,
        in_specs=in_specs,
        out_specs=out_specs,
        compiler_params=pltpu.CompilerParams(
            dimension_semantics=("parallel",),
            vmem_limit_bytes=32 * 1024 * 1024),
    )(x, mask2, wqkv, bqkv, wo, bo, w1, b1, w2, b2)

    return pooled[:B], w2d[:B].reshape(B, L, 1)


def init_params(key):
    ks = jax.random.split(key, 12)
    s = 0.05
    wq = jax.random.normal(ks[0], (HIDDEN, HIDDEN), jnp.float32) * s
    wk = jax.random.normal(ks[1], (HIDDEN, HIDDEN), jnp.float32) * s
    wv = jax.random.normal(ks[2], (HIDDEN, HIDDEN), jnp.float32) * s
    wo = jax.random.normal(ks[3], (HIDDEN, HIDDEN), jnp.float32) * s
    bq = jax.random.normal(ks[4], (1, HIDDEN), jnp.float32) * s
    bk = jax.random.normal(ks[5], (1, HIDDEN), jnp.float32) * s
    bv = jax.random.normal(ks[6], (1, HIDDEN), jnp.float32) * s
    bo = jax.random.normal(ks[7], (1, HIDDEN), jnp.float32) * s
    w1 = jax.random.normal(ks[8], (HIDDEN, FC_HIDDEN), jnp.float32) * s
    b1 = jax.random.normal(ks[9], (1, FC_HIDDEN), jnp.float32) * s
    w2 = jax.random.normal(ks[10], (1, FC_HIDDEN), jnp.float32) * s   # PyTorch fc2.weight layout
    b2 = jax.random.normal(ks[11], (1, 1), jnp.float32) * s
    return (wq, bq, wk, bk, wv, bv, wo, bo, w1, b1, w2, b2)


def reference_forward(x, mask, params):
    """Pure-JAX reference matching the PyTorch module semantics (eval mode)."""
    wq, bq, wk, bk, wv, bv, wo, bo, w1, b1, w2, b2 = params
    B, L, E = x.shape
    mask_f = mask.astype(jnp.float32)
    q = x @ wq + bq
    k = x @ wk + bk
    v = x @ wv + bv
    qh = q.reshape(B, L, HEADS, HEAD_DIM).transpose(0, 2, 1, 3)
    kh = k.reshape(B, L, HEADS, HEAD_DIM).transpose(0, 2, 1, 3)
    vh = v.reshape(B, L, HEADS, HEAD_DIM).transpose(0, 2, 1, 3)
    s = jnp.einsum("bhqd,bhkd->bhqk", qh, kh) / math.sqrt(HEAD_DIM)
    s = s + jnp.where(mask_f > 0.5, 0.0, -1e30)[:, None, None, :]
    p = jax.nn.softmax(s, axis=-1)
    o = jnp.einsum("bhqk,bhkd->bhqd", p, vh).transpose(0, 2, 1, 3).reshape(B, L, E)
    attn = o @ wo + bo
    w = jax.nn.sigmoid(jnp.tanh(attn @ w1 + b1) @ w2.T + b2)
    w = w * mask_f[..., None]
    w = w / (jnp.sum(w, axis=1, keepdims=True) + 1e-9)
    pooled = jnp.sum(w * attn, axis=1)
    return pooled, w


if __name__ == "__main__":
    B, L = 2, 8
    key = jax.random.PRNGKey(0)
    k_x, k_p = jax.random.split(key)
    hidden_states = jax.random.normal(k_x, (B, L, HIDDEN), jnp.float32)
    attention_mask = jnp.array(
        [[1, 1, 1, 1, 1, 1, 1, 1],
         [1, 1, 1, 1, 1, 0, 0, 0]], dtype=jnp.float32)
    params = init_params(k_p)

    pooled, weights = multi_head_attention_pooling(hidden_states, attention_mask, params)
    pooled = jax.block_until_ready(pooled)
    weights = jax.block_until_ready(weights)

    ref_pooled, ref_weights = reference_forward(hidden_states, attention_mask, params)
    assert pooled.shape == (B, HIDDEN) and weights.shape == (B, L, 1)
    # Tolerance covers the EUP approximate reciprocals (sigmoid, softmax denom, weight norm).
    assert jnp.allclose(pooled, ref_pooled, rtol=1e-3, atol=1e-3)
    assert jnp.allclose(weights, ref_weights, rtol=1e-3, atol=1e-3)

    print("KERNEL_OK")
</pallas_src>

<mosaic_0001>
module attributes {stable_mosaic.version = 11 : i64} {
  func.func @_mha_pool_kernel(%arg0: i32, %arg1: memref<2x8x32xf32, #tpu.memory_space<vmem>>, %arg2: memref<2x8xf32, #tpu.memory_space<vmem>>, %arg3: memref<32x96xf32, #tpu.memory_space<vmem>>, %arg4: memref<1x96xf32, #tpu.memory_space<vmem>>, %arg5: memref<32x32xf32, #tpu.memory_space<vmem>>, %arg6: memref<1x32xf32, #tpu.memory_space<vmem>>, %arg7: memref<32x128xf32, #tpu.memory_space<vmem>>, %arg8: memref<1x128xf32, #tpu.memory_space<vmem>>, %arg9: memref<1x128xf32, #tpu.memory_space<vmem>>, %arg10: memref<1x1xf32, #tpu.memory_space<smem>>, %arg11: memref<2x32xf32, #tpu.memory_space<vmem>>, %arg12: memref<2x8xf32, #tpu.memory_space<vmem>>) attributes {dimension_semantics = [#tpu.dimension_semantics<parallel>], iteration_bounds = array<i64: 1>, scalar_prefetch = 0 : i64, scratch_operands = 0 : i64, tpu.core_type = #tpu.core_type<tc>, window_params = [{transform_indices = @transform_0, window_bounds = array<i64: 2, 8, 32>}, {transform_indices = @transform_1, window_bounds = array<i64: 2, 8>}, {pipeline_mode = #tpu.pipeline_mode<synchronous>, transform_indices = @transform_2, window_bounds = array<i64: 32, 96>}, {pipeline_mode = #tpu.pipeline_mode<synchronous>, transform_indices = @transform_3, window_bounds = array<i64: 1, 96>}, {pipeline_mode = #tpu.pipeline_mode<synchronous>, transform_indices = @transform_4, window_bounds = array<i64: 32, 32>}, {pipeline_mode = #tpu.pipeline_mode<synchronous>, transform_indices = @transform_5, window_bounds = array<i64: 1, 32>}, {pipeline_mode = #tpu.pipeline_mode<synchronous>, transform_indices = @transform_6, window_bounds = array<i64: 32, 128>}, {pipeline_mode = #tpu.pipeline_mode<synchronous>, transform_indices = @transform_7, window_bounds = array<i64: 1, 128>}, {pipeline_mode = #tpu.pipeline_mode<synchronous>, transform_indices = @transform_8, window_bounds = array<i64: 1, 128>}, {transform_indices = @transform_9, window_bounds = array<i64: 1, 1>}, {transform_indices = @transform_10, window_bounds = array<i64: 2, 32>}, {transform_indices = @transform_11, window_bounds = array<i64: 2, 8>}]} {
    %c0 = arith.constant 0 : index
    %c0_0 = arith.constant 0 : index
    %c0_1 = arith.constant 0 : index
    %0 = vector.load %arg1[%c0, %c0_0, %c0_1] : memref<2x8x32xf32, #tpu.memory_space<vmem>>, vector<2x8x32xf32>
    %c0_2 = arith.constant 0 : index
    %c0_3 = arith.constant 0 : index
    %1 = vector.load %arg2[%c0_2, %c0_3] : memref<2x8xf32, #tpu.memory_space<vmem>>, vector<2x8xf32>
    %2 = vector.shape_cast %0 : vector<2x8x32xf32> to vector<16x32xf32>
    %c0_4 = arith.constant 0 : index
    %c0_5 = arith.constant 0 : index
    %3 = vector.load %arg3[%c0_4, %c0_5] : memref<32x96xf32, #tpu.memory_space<vmem>>, vector<32x96xf32>
    %cst = arith.constant dense<0.000000e+00> : vector<16x96xf32>
    %4 = tpu.matmul %2, %3, %cst {dimension_numbers = #tpu.dot_dimension_numbers<[1], [0], [0], [1], [0, 0, 1, 1], [], []>} : vector<16x32xf32>, vector<32x96xf32>, vector<16x96xf32> -> vector<16x96xf32>
    %c0_6 = arith.constant 0 : index
    %c0_7 = arith.constant 0 : index
    %5 = vector.load %arg4[%c0_6, %c0_7] : memref<1x96xf32, #tpu.memory_space<vmem>>, vector<1x96xf32>
    %6 = vector.broadcast %5 : vector<1x96xf32> to vector<16x96xf32>
    %7 = arith.addf %4, %6 : vector<16x96xf32>
    %8 = vector.shape_cast %7 : vector<16x96xf32> to vector<2x8x96xf32>
    %9 = vector.extract_strided_slice %8 {offsets = [0, 0, 0], sizes = [2, 8, 32], strides = [1, 1, 1]} : vector<2x8x96xf32> to vector<2x8x32xf32>
    %10 = vector.extract_strided_slice %8 {offsets = [0, 0, 32], sizes = [2, 8, 32], strides = [1, 1, 1]} : vector<2x8x96xf32> to vector<2x8x32xf32>
    %11 = vector.extract_strided_slice %8 {offsets = [0, 0, 64], sizes = [2, 8, 32], strides = [1, 1, 1]} : vector<2x8x96xf32> to vector<2x8x32xf32>
    %12 = vector.shape_cast %1 : vector<2x8xf32> to vector<2x1x8xf32>
    %cst_8 = arith.constant 5.000000e-01 : f32
    %13 = vector.broadcast %cst_8 : f32 to vector<2x1x8xf32>
    %14 = arith.cmpf ogt, %12, %13 : vector<2x1x8xf32>
    %cst_9 = arith.constant 0.000000e+00 : f32
    %cst_10 = arith.constant -1.000000e+30 : f32
    %15 = vector.broadcast %cst_9 : f32 to vector<2x1x8xf32>
    %16 = vector.broadcast %cst_10 : f32 to vector<2x1x8xf32>
    %17 = arith.select %14, %15, %16 : vector<2x1x8xi1>, vector<2x1x8xf32>
    %18 = tpu.iota {dimensions = array<i32: 2>} : vector<1x1x32xi32>
    %cst_11 = arith.constant 0.000000e+00 : f32
    %19 = vector.broadcast %cst_11 : f32 to vector<2x8x32xf32>
    %c0_i32 = arith.constant 0 : i32
    %20 = vector.broadcast %c0_i32 : i32 to vector<1x1x32xi32>
    %21 = arith.cmpi sge, %18, %20 : vector<1x1x32xi32>
    %c4_i32 = arith.constant 4 : i32
    %22 = vector.broadcast %c4_i32 : i32 to vector<1x1x32xi32>
    %23 = arith.cmpi slt, %18, %22 : vector<1x1x32xi32>
    %24 = arith.andi %21, %23 : vector<1x1x32xi1>
    %cst_12 = arith.constant 0.000000e+00 : f32
    %25 = vector.shape_cast %24 : vector<1x1x32xi1> to vector<1x1x32xi1>
    %26 = vector.broadcast %25 : vector<1x1x32xi1> to vector<2x8x32xi1>
    %27 = vector.broadcast %cst_12 : f32 to vector<2x8x32xf32>
    %28 = arith.select %26, %9, %27 : vector<2x8x32xi1>, vector<2x8x32xf32>
    %cst_13 = arith.constant 0.000000e+00 : f32
    %29 = vector.shape_cast %24 : vector<1x1x32xi1> to vector<1x1x32xi1>
    %30 = vector.broadcast %29 : vector<1x1x32xi1> to vector<2x8x32xi1>
    %31 = vector.broadcast %cst_13 : f32 to vector<2x8x32xf32>
    %32 = arith.select %30, %11, %31 : vector<2x8x32xi1>, vector<2x8x32xf32>
    "tpu.trace_start"() <{level = 10 : i32, message = "tle,tme->tlm"}> : () -> ()
    %cst_14 = arith.constant dense<0.000000e+00> : vector<2x8x8xf32>
    %33 = tpu.matmul %28, %10, %cst_14 {dimension_numbers = #tpu.dot_dimension_numbers<[2], [2], [1], [1], [0, 0, 0, 1, 1, 1], [0], [0]>} : vector<2x8x32xf32>, vector<2x8x32xf32>, vector<2x8x8xf32> -> vector<2x8x8xf32>
    "tpu.trace_stop"() : () -> ()
    %cst_15 = arith.constant 5.000000e-01 : f32
    %34 = vector.broadcast %cst_15 : f32 to vector<2x8x8xf32>
    %35 = arith.mulf %33, %34 : vector<2x8x8xf32>
    %36 = vector.broadcast %17 : vector<2x1x8xf32> to vector<2x8x8xf32>
    %37 = arith.addf %35, %36 : vector<2x8x8xf32>
    %cst_16 = arith.constant dense<0xFF800000> : vector<2x8xf32>
    %38 = vector.multi_reduction <maximumf>, %37, %cst_16 [2] : vector<2x8x8xf32> to vector<2x8xf32>
    %39 = vector.shape_cast %38 : vector<2x8xf32> to vector<2x8x1xf32>
    %40 = vector.broadcast %39 : vector<2x8x1xf32> to vector<2x8x8xf32>
    %41 = arith.subf %37, %40 : vector<2x8x8xf32>
    %42 = math.exp %41 : vector<2x8x8xf32>
    %cst_17 = arith.constant dense<0.000000e+00> : vector<2x8xf32>
    %43 = vector.multi_reduction <add>, %42, %cst_17 [2] : vector<2x8x8xf32> to vector<2x8xf32>
    %44 = vector.shape_cast %43 : vector<2x8xf32> to vector<2x8x1xf32>
    %45 = tpu.reciprocal %44 {approx = true} : vector<2x8x1xf32> -> vector<2x8x1xf32>
    %46 = vector.broadcast %45 : vector<2x8x1xf32> to vector<2x8x8xf32>
    %47 = arith.mulf %42, %46 : vector<2x8x8xf32>
    "tpu.trace_start"() <{level = 10 : i32, message = "tlm,tme->tle"}> : () -> ()
    %cst_18 = arith.constant dense<0.000000e+00> : vector<2x8x32xf32>
    %48 = tpu.matmul %47, %32, %cst_18 {dimension_numbers = #tpu.dot_dimension_numbers<[2], [1], [1], [2], [0, 0, 0, 1, 1, 2], [0], [0]>} : vector<2x8x8xf32>, vector<2x8x32xf32>, vector<2x8x32xf32> -> vector<2x8x32xf32>
    "tpu.trace_stop"() : () -> ()
    %49 = arith.addf %19, %48 : vector<2x8x32xf32>
    %c4_i32_19 = arith.constant 4 : i32
    %50 = vector.broadcast %c4_i32_19 : i32 to vector<1x1x32xi32>
    %51 = arith.cmpi sge, %18, %50 : vector<1x1x32xi32>
    %c8_i32 = arith.constant 8 : i32
    %52 = vector.broadcast %c8_i32 : i32 to vector<1x1x32xi32>
    %53 = arith.cmpi slt, %18, %52 : vector<1x1x32xi32>
    %54 = arith.andi %51, %53 : vector<1x1x32xi1>
    %cst_20 = arith.constant 0.000000e+00 : f32
    %55 = vector.shape_cast %54 : vector<1x1x32xi1> to vector<1x1x32xi1>
    %56 = vector.broadcast %55 : vector<1x1x32xi1> to vector<2x8x32xi1>
    %57 = vector.broadcast %cst_20 : f32 to vector<2x8x32xf32>
    %58 = arith.select %56, %9, %57 : vector<2x8x32xi1>, vector<2x8x32xf32>
    %cst_21 = arith.constant 0.000000e+00 : f32
    %59 = vector.shape_cast %54 : vector<1x1x32xi1> to vector<1x1x32xi1>
    %60 = vector.broadcast %59 : vector<1x1x32xi1> to vector<2x8x32xi1>
    %61 = vector.broadcast %cst_21 : f32 to vector<2x8x32xf32>
    %62 = arith.select %60, %11, %61 : vector<2x8x32xi1>, vector<2x8x32xf32>
    "tpu.trace_start"() <{level = 10 : i32, message = "tle,tme->tlm"}> : () -> ()
    %cst_22 = arith.constant dense<0.000000e+00> : vector<2x8x8xf32>
    %63 = tpu.matmul %58, %10, %cst_22 {dimension_numbers = #tpu.dot_dimension_numbers<[2], [2], [1], [1], [0, 0, 0, 1, 1, 1], [0], [0]>} : vector<2x8x32xf32>, vector<2x8x32xf32>, vector<2x8x8xf32> -> vector<2x8x8xf32>
    "tpu.trace_stop"() : () -> ()
    %cst_23 = arith.constant 5.000000e-01 : f32
    %64 = vector.broadcast %cst_23 : f32 to vector<2x8x8xf32>
    %65 = arith.mulf %63, %64 : vector<2x8x8xf32>
    %66 = vector.broadcast %17 : vector<2x1x8xf32> to vector<2x8x8xf32>
    %67 = arith.addf %65, %66 : vector<2x8x8xf32>
    %cst_24 = arith.constant dense<0xFF800000> : vector<2x8xf32>
    %68 = vector.multi_reduction <maximumf>, %67, %cst_24 [2] : vector<2x8x8xf32> to vector<2x8xf32>
    %69 = vector.shape_cast %68 : vector<2x8xf32> to vector<2x8x1xf32>
    %70 = vector.broadcast %69 : vector<2x8x1xf32> to vector<2x8x8xf32>
    %71 = arith.subf %67, %70 : vector<2x8x8xf32>
    %72 = math.exp %71 : vector<2x8x8xf32>
    %cst_25 = arith.constant dense<0.000000e+00> : vector<2x8xf32>
    %73 = vector.multi_reduction <add>, %72, %cst_25 [2] : vector<2x8x8xf32> to vector<2x8xf32>
    %74 = vector.shape_cast %73 : vector<2x8xf32> to vector<2x8x1xf32>
    %75 = tpu.reciprocal %74 {approx = true} : vector<2x8x1xf32> -> vector<2x8x1xf32>
    %76 = vector.broadcast %75 : vector<2x8x1xf32> to vector<2x8x8xf32>
    %77 = arith.mulf %72, %76 : vector<2x8x8xf32>
    "tpu.trace_start"() <{level = 10 : i32, message = "tlm,tme->tle"}> : () -> ()
    %cst_26 = arith.constant dense<0.000000e+00> : vector<2x8x32xf32>
    %78 = tpu.matmul %77, %62, %cst_26 {dimension_numbers = #tpu.dot_dimension_numbers<[2], [1], [1], [2], [0, 0, 0, 1, 1, 2], [0], [0]>} : vector<2x8x8xf32>, vector<2x8x32xf32>, vector<2x8x32xf32> -> vector<2x8x32xf32>
    "tpu.trace_stop"() : () -> ()
    %79 = arith.addf %49, %78 : vector<2x8x32xf32>
    %c8_i32_27 = arith.constant 8 : i32
    %80 = vector.broadcast %c8_i32_27 : i32 to vector<1x1x32xi32>
    %81 = arith.cmpi sge, %18, %80 : vector<1x1x32xi32>
    %c12_i32 = arith.constant 12 : i32
    %82 = vector.broadcast %c12_i32 : i32 to vector<1x1x32xi32>
    %83 = arith.cmpi slt, %18, %82 : vector<1x1x32xi32>
    %84 = arith.andi %81, %83 : vector<1x1x32xi1>
    %cst_28 = arith.constant 0.000000e+00 : f32
    %85 = vector.shape_cast %84 : vector<1x1x32xi1> to vector<1x1x32xi1>
    %86 = vector.broadcast %85 : vector<1x1x32xi1> to vector<2x8x32xi1>
    %87 = vector.broadcast %cst_28 : f32 to vector<2x8x32xf32>
    %88 = arith.select %86, %9, %87 : vector<2x8x32xi1>, vector<2x8x32xf32>
    %cst_29 = arith.constant 0.000000e+00 : f32
    %89 = vector.shape_cast %84 : vector<1x1x32xi1> to vector<1x1x32xi1>
    %90 = vector.broadcast %89 : vector<1x1x32xi1> to vector<2x8x32xi1>
    %91 = vector.broadcast %cst_29 : f32 to vector<2x8x32xf32>
    %92 = arith.select %90, %11, %91 : vector<2x8x32xi1>, vector<2x8x32xf32>
    "tpu.trace_start"() <{level = 10 : i32, message = "tle,tme->tlm"}> : () -> ()
    %cst_30 = arith.constant dense<0.000000e+00> : vector<2x8x8xf32>
    %93 = tpu.matmul %88, %10, %cst_30 {dimension_numbers = #tpu.dot_dimension_numbers<[2], [2], [1], [1], [0, 0, 0, 1, 1, 1], [0], [0]>} : vector<2x8x32xf32>, vector<2x8x32xf32>, vector<2x8x8xf32> -> vector<2x8x8xf32>
    "tpu.trace_stop"() : () -> ()
    %cst_31 = arith.constant 5.000000e-01 : f32
    %94 = vector.broadcast %cst_31 : f32 to vector<2x8x8xf32>
    %95 = arith.mulf %93, %94 : vector<2x8x8xf32>
    %96 = vector.broadcast %17 : vector<2x1x8xf32> to vector<2x8x8xf32>
    %97 = arith.addf %95, %96 : vector<2x8x8xf32>
    %cst_32 = arith.constant dense<0xFF800000> : vector<2x8xf32>
    %98 = vector.multi_reduction <maximumf>, %97, %cst_32 [2] : vector<2x8x8xf32> to vector<2x8xf32>
    %99 = vector.shape_cast %98 : vector<2x8xf32> to vector<2x8x1xf32>
    %100 = vector.broadcast %99 : vector<2x8x1xf32> to vector<2x8x8xf32>
    %101 = arith.subf %97, %100 : vector<2x8x8xf32>
    %102 = math.exp %101 : vector<2x8x8xf32>
    %cst_33 = arith.constant dense<0.000000e+00> : vector<2x8xf32>
    %103 = vector.multi_reduction <add>, %102, %cst_33 [2] : vector<2x8x8xf32> to vector<2x8xf32>
    %104 = vector.shape_cast %103 : vector<2x8xf32> to vector<2x8x1xf32>
    %105 = tpu.reciprocal %104 {approx = true} : vector<2x8x1xf32> -> vector<2x8x1xf32>
    %106 = vector.broadcast %105 : vector<2x8x1xf32> to vector<2x8x8xf32>
    %107 = arith.mulf %102, %106 : vector<2x8x8xf32>
    "tpu.trace_start"() <{level = 10 : i32, message = "tlm,tme->tle"}> : () -> ()
    %cst_34 = arith.constant dense<0.000000e+00> : vector<2x8x32xf32>
    %108 = tpu.matmul %107, %92, %cst_34 {dimension_numbers = #tpu.dot_dimension_numbers<[2], [1], [1], [2], [0, 0, 0, 1, 1, 2], [0], [0]>} : vector<2x8x8xf32>, vector<2x8x32xf32>, vector<2x8x32xf32> -> vector<2x8x32xf32>
    "tpu.trace_stop"() : () -> ()
    %109 = arith.addf %79, %108 : vector<2x8x32xf32>
    %c12_i32_35 = arith.constant 12 : i32
    %110 = vector.broadcast %c12_i32_35 : i32 to vector<1x1x32xi32>
    %111 = arith.cmpi sge, %18, %110 : vector<1x1x32xi32>
    %c16_i32 = arith.constant 16 : i32
    %112 = vector.broadcast %c16_i32 : i32 to vector<1x1x32xi32>
    %113 = arith.cmpi slt, %18, %112 : vector<1x1x32xi32>
    %114 = arith.andi %111, %113 : vector<1x1x32xi1>
    %cst_36 = arith.constant 0.000000e+00 : f32
    %115 = vector.shape_cast %114 : vector<1x1x32xi1> to vector<1x1x32xi1>
    %116 = vector.broadcast %115 : vector<1x1x32xi1> to vector<2x8x32xi1>
    %117 = vector.broadcast %cst_36 : f32 to vector<2x8x32xf32>
    %118 = arith.select %116, %9, %117 : vector<2x8x32xi1>, vector<2x8x32xf32>
    %cst_37 = arith.constant 0.000000e+00 : f32
    %119 = vector.shape_cast %114 : vector<1x1x32xi1> to vector<1x1x32xi1>
    %120 = vector.broadcast %119 : vector<1x1x32xi1> to vector<2x8x32xi1>
    %121 = vector.broadcast %cst_37 : f32 to vector<2x8x32xf32>
    %122 = arith.select %120, %11, %121 : vector<2x8x32xi1>, vector<2x8x32xf32>
    "tpu.trace_start"() <{level = 10 : i32, message = "tle,tme->tlm"}> : () -> ()
    %cst_38 = arith.constant dense<0.000000e+00> : vector<2x8x8xf32>
    %123 = tpu.matmul %118, %10, %cst_38 {dimension_numbers = #tpu.dot_dimension_numbers<[2], [2], [1], [1], [0, 0, 0, 1, 1, 1], [0], [0]>} : vector<2x8x32xf32>, vector<2x8x32xf32>, vector<2x8x8xf32> -> vector<2x8x8xf32>
    "tpu.trace_stop"() : () -> ()
    %cst_39 = arith.constant 5.000000e-01 : f32
    %124 = vector.broadcast %cst_39 : f32 to vector<2x8x8xf32>
    %125 = arith.mulf %123, %124 : vector<2x8x8xf32>
    %126 = vector.broadcast %17 : vector<2x1x8xf32> to vector<2x8x8xf32>
    %127 = arith.addf %125, %126 : vector<2x8x8xf32>
    %cst_40 = arith.constant dense<0xFF800000> : vector<2x8xf32>
    %128 = vector.multi_reduction <maximumf>, %127, %cst_40 [2] : vector<2x8x8xf32> to vector<2x8xf32>
    %129 = vector.shape_cast %128 : vector<2x8xf32> to vector<2x8x1xf32>
    %130 = vector.broadcast %129 : vector<2x8x1xf32> to vector<2x8x8xf32>
    %131 = arith.subf %127, %130 : vector<2x8x8xf32>
    %132 = math.exp %131 : vector<2x8x8xf32>
    %cst_41 = arith.constant dense<0.000000e+00> : vector<2x8xf32>
    %133 = vector.multi_reduction <add>, %132, %cst_41 [2] : vector<2x8x8xf32> to vector<2x8xf32>
    %134 = vector.shape_cast %133 : vector<2x8xf32> to vector<2x8x1xf32>
    %135 = tpu.reciprocal %134 {approx = true} : vector<2x8x1xf32> -> vector<2x8x1xf32>
    %136 = vector.broadcast %135 : vector<2x8x1xf32> to vector<2x8x8xf32>
    %137 = arith.mulf %132, %136 : vector<2x8x8xf32>
    "tpu.trace_start"() <{level = 10 : i32, message = "tlm,tme->tle"}> : () -> ()
    %cst_42 = arith.constant dense<0.000000e+00> : vector<2x8x32xf32>
    %138 = tpu.matmul %137, %122, %cst_42 {dimension_numbers = #tpu.dot_dimension_numbers<[2], [1], [1], [2], [0, 0, 0, 1, 1, 2], [0], [0]>} : vector<2x8x8xf32>, vector<2x8x32xf32>, vector<2x8x32xf32> -> vector<2x8x32xf32>
    "tpu.trace_stop"() : () -> ()
    %139 = arith.addf %109, %138 : vector<2x8x32xf32>
    %c16_i32_43 = arith.constant 16 : i32
    %140 = vector.broadcast %c16_i32_43 : i32 to vector<1x1x32xi32>
    %141 = arith.cmpi sge, %18, %140 : vector<1x1x32xi32>
    %c20_i32 = arith.constant 20 : i32
    %142 = vector.broadcast %c20_i32 : i32 to vector<1x1x32xi32>
    %143 = arith.cmpi slt, %18, %142 : vector<1x1x32xi32>
    %144 = arith.andi %141, %143 : vector<1x1x32xi1>
    %cst_44 = arith.constant 0.000000e+00 : f32
    %145 = vector.shape_cast %144 : vector<1x1x32xi1> to vector<1x1x32xi1>
    %146 = vector.broadcast %145 : vector<1x1x32xi1> to vector<2x8x32xi1>
    %147 = vector.broadcast %cst_44 : f32 to vector<2x8x32xf32>
    %148 = arith.select %146, %9, %147 : vector<2x8x32xi1>, vector<2x8x32xf32>
    %cst_45 = arith.constant 0.000000e+00 : f32
    %149 = vector.shape_cast %144 : vector<1x1x32xi1> to vector<1x1x32xi1>
    %150 = vector.broadcast %149 : vector<1x1x32xi1> to vector<2x8x32xi1>
    %151 = vector.broadcast %cst_45 : f32 to vector<2x8x32xf32>
    %152 = arith.select %150, %11, %151 : vector<2x8x32xi1>, vector<2x8x32xf32>
    "tpu.trace_start"() <{level = 10 : i32, message = "tle,tme->tlm"}> : () -> ()
    %cst_46 = arith.constant dense<0.000000e+00> : vector<2x8x8xf32>
    %153 = tpu.matmul %148, %10, %cst_46 {dimension_numbers = #tpu.dot_dimension_numbers<[2], [2], [1], [1], [0, 0, 0, 1, 1, 1], [0], [0]>} : vector<2x8x32xf32>, vector<2x8x32xf32>, vector<2x8x8xf32> -> vector<2x8x8xf32>
    "tpu.trace_stop"() : () -> ()
    %cst_47 = arith.constant 5.000000e-01 : f32
    %154 = vector.broadcast %cst_47 : f32 to vector<2x8x8xf32>
    %155 = arith.mulf %153, %154 : vector<2x8x8xf32>
    %156 = vector.broadcast %17 : vector<2x1x8xf32> to vector<2x8x8xf32>
    %157 = arith.addf %155, %156 : vector<2x8x8xf32>
    %cst_48 = arith.constant dense<0xFF800000> : vector<2x8xf32>
    %158 = vector.multi_reduction <maximumf>, %157, %cst_48 [2] : vector<2x8x8xf32> to vector<2x8xf32>
    %159 = vector.shape_cast %158 : vector<2x8xf32> to vector<2x8x1xf32>
    %160 = vector.broadcast %159 : vector<2x8x1xf32> to vector<2x8x8xf32>
    %161 = arith.subf %157, %160 : vector<2x8x8xf32>
    %162 = math.exp %161 : vector<2x8x8xf32>
    %cst_49 = arith.constant dense<0.000000e+00> : vector<2x8xf32>
    %163 = vector.multi_reduction <add>, %162, %cst_49 [2] : vector<2x8x8xf32> to vector<2x8xf32>
    %164 = vector.shape_cast %163 : vector<2x8xf32> to vector<2x8x1xf32>
    %165 = tpu.reciprocal %164 {approx = true} : vector<2x8x1xf32> -> vector<2x8x1xf32>
    %166 = vector.broadcast %165 : vector<2x8x1xf32> to vector<2x8x8xf32>
    %167 = arith.mulf %162, %166 : vector<2x8x8xf32>
    "tpu.trace_start"() <{level = 10 : i32, message = "tlm,tme->tle"}> : () -> ()
    %cst_50 = arith.constant dense<0.000000e+00> : vector<2x8x32xf32>
    %168 = tpu.matmul %167, %152, %cst_50 {dimension_numbers = #tpu.dot_dimension_numbers<[2], [1], [1], [2], [0, 0, 0, 1, 1, 2], [0], [0]>} : vector<2x8x8xf32>, vector<2x8x32xf32>, vector<2x8x32xf32> -> vector<2x8x32xf32>
    "tpu.trace_stop"() : () -> ()
    %169 = arith.addf %139, %168 : vector<2x8x32xf32>
    %c20_i32_51 = arith.constant 20 : i32
    %170 = vector.broadcast %c20_i32_51 : i32 to vector<1x1x32xi32>
    %171 = arith.cmpi sge, %18, %170 : vector<1x1x32xi32>
    %c24_i32 = arith.constant 24 : i32
    %172 = vector.broadcast %c24_i32 : i32 to vector<1x1x32xi32>
    %173 = arith.cmpi slt, %18, %172 : vector<1x1x32xi32>
    %174 = arith.andi %171, %173 : vector<1x1x32xi1>
    %cst_52 = arith.constant 0.000000e+00 : f32
    %175 = vector.shape_cast %174 : vector<1x1x32xi1> to vector<1x1x32xi1>
    %176 = vector.broadcast %175 : vector<1x1x32xi1> to vector<2x8x32xi1>
    %177 = vector.broadcast %cst_52 : f32 to vector<2x8x32xf32>
    %178 = arith.select %176, %9, %177 : vector<2x8x32xi1>, vector<2x8x32xf32>
    %cst_53 = arith.constant 0.000000e+00 : f32
    %179 = vector.shape_cast %174 : vector<1x1x32xi1> to vector<1x1x32xi1>
    %180 = vector.broadcast %179 : vector<1x1x32xi1> to vector<2x8x32xi1>
    %181 = vector.broadcast %cst_53 : f32 to vector<2x8x32xf32>
    %182 = arith.select %180, %11, %181 : vector<2x8x32xi1>, vector<2x8x32xf32>
    "tpu.trace_start"() <{level = 10 : i32, message = "tle,tme->tlm"}> : () -> ()
    %cst_54 = arith.constant dense<0.000000e+00> : vector<2x8x8xf32>
    %183 = tpu.matmul %178, %10, %cst_54 {dimension_numbers = #tpu.dot_dimension_numbers<[2], [2], [1], [1], [0, 0, 0, 1, 1, 1], [0], [0]>} : vector<2x8x32xf32>, vector<2x8x32xf32>, vector<2x8x8xf32> -> vector<2x8x8xf32>
    "tpu.trace_stop"() : () -> ()
    %cst_55 = arith.constant 5.000000e-01 : f32
    %184 = vector.broadcast %cst_55 : f32 to vector<2x8x8xf32>
    %185 = arith.mulf %183, %184 : vector<2x8x8xf32>
    %186 = vector.broadcast %17 : vector<2x1x8xf32> to vector<2x8x8xf32>
    %187 = arith.addf %185, %186 : vector<2x8x8xf32>
    %cst_56 = arith.constant dense<0xFF800000> : vector<2x8xf32>
    %188 = vector.multi_reduction <maximumf>, %187, %cst_56 [2] : vector<2x8x8xf32> to vector<2x8xf32>
    %189 = vector.shape_cast %188 : vector<2x8xf32> to vector<2x8x1xf32>
    %190 = vector.broadcast %189 : vector<2x8x1xf32> to vector<2x8x8xf32>
    %191 = arith.subf %187, %190 : vector<2x8x8xf32>
    %192 = math.exp %191 : vector<2x8x8xf32>
    %cst_57 = arith.constant dense<0.000000e+00> : vector<2x8xf32>
    %193 = vector.multi_reduction <add>, %192, %cst_57 [2] : vector<2x8x8xf32> to vector<2x8xf32>
    %194 = vector.shape_cast %193 : vector<2x8xf32> to vector<2x8x1xf32>
    %195 = tpu.reciprocal %194 {approx = true} : vector<2x8x1xf32> -> vector<2x8x1xf32>
    %196 = vector.broadcast %195 : vector<2x8x1xf32> to vector<2x8x8xf32>
    %197 = arith.mulf %192, %196 : vector<2x8x8xf32>
    "tpu.trace_start"() <{level = 10 : i32, message = "tlm,tme->tle"}> : () -> ()
    %cst_58 = arith.constant dense<0.000000e+00> : vector<2x8x32xf32>
    %198 = tpu.matmul %197, %182, %cst_58 {dimension_numbers = #tpu.dot_dimension_numbers<[2], [1], [1], [2], [0, 0, 0, 1, 1, 2], [0], [0]>} : vector<2x8x8xf32>, vector<2x8x32xf32>, vector<2x8x32xf32> -> vector<2x8x32xf32>
    "tpu.trace_stop"() : () -> ()
    %199 = arith.addf %169, %198 : vector<2x8x32xf32>
    %c24_i32_59 = arith.constant 24 : i32
    %200 = vector.broadcast %c24_i32_59 : i32 to vector<1x1x32xi32>
    %201 = arith.cmpi sge, %18, %200 : vector<1x1x32xi32>
    %c28_i32 = arith.constant 28 : i32
    %202 = vector.broadcast %c28_i32 : i32 to vector<1x1x32xi32>
    %203 = arith.cmpi slt, %18, %202 : vector<1x1x32xi32>
    %204 = arith.andi %201, %203 : vector<1x1x32xi1>
    %cst_60 = arith.constant 0.000000e+00 : f32
    %205 = vector.shape_cast %204 : vector<1x1x32xi1> to vector<1x1x32xi1>
    %206 = vector.broadcast %205 : vector<1x1x32xi1> to vector<2x8x32xi1>
    %207 = vector.broadcast %cst_60 : f32 to vector<2x8x32xf32>
    %208 = arith.select %206, %9, %207 : vector<2x8x32xi1>, vector<2x8x32xf32>
    %cst_61 = arith.constant 0.000000e+00 : f32
    %209 = vector.shape_cast %204 : vector<1x1x32xi1> to vector<1x1x32xi1>
    %210 = vector.broadcast %209 : vector<1x1x32xi1> to vector<2x8x32xi1>
    %211 = vector.broadcast %cst_61 : f32 to vector<2x8x32xf32>
    %212 = arith.select %210, %11, %211 : vector<2x8x32xi1>, vector<2x8x32xf32>
    "tpu.trace_start"() <{level = 10 : i32, message = "tle,tme->tlm"}> : () -> ()
    %cst_62 = arith.constant dense<0.000000e+00> : vector<2x8x8xf32>
    %213 = tpu.matmul %208, %10, %cst_62 {dimension_numbers = #tpu.dot_dimension_numbers<[2], [2], [1], [1], [0, 0, 0, 1, 1, 1], [0], [0]>} : vector<2x8x32xf32>, vector<2x8x32xf32>, vector<2x8x8xf32> -> vector<2x8x8xf32>
    "tpu.trace_stop"() : () -> ()
    %cst_63 = arith.constant 5.000000e-01 : f32
    %214 = vector.broadcast %cst_63 : f32 to vector<2x8x8xf32>
    %215 = arith.mulf %213, %214 : vector<2x8x8xf32>
    %216 = vector.broadcast %17 : vector<2x1x8xf32> to vector<2x8x8xf32>
    %217 = arith.addf %215, %216 : vector<2x8x8xf32>
    %cst_64 = arith.constant dense<0xFF800000> : vector<2x8xf32>
    %218 = vector.multi_reduction <maximumf>, %217, %cst_64 [2] : vector<2x8x8xf32> to vector<2x8xf32>
    %219 = vector.shape_cast %218 : vector<2x8xf32> to vector<2x8x1xf32>
    %220 = vector.broadcast %219 : vector<2x8x1xf32> to vector<2x8x8xf32>
    %221 = arith.subf %217, %220 : vector<2x8x8xf32>
    %222 = math.exp %221 : vector<2x8x8xf32>
    %cst_65 = arith.constant dense<0.000000e+00> : vector<2x8xf32>
    %223 = vector.multi_reduction <add>, %222, %cst_65 [2] : vector<2x8x8xf32> to vector<2x8xf32>
    %224 = vector.shape_cast %223 : vector<2x8xf32> to vector<2x8x1xf32>
    %225 = tpu.reciprocal %224 {approx = true} : vector<2x8x1xf32> -> vector<2x8x1xf32>
    %226 = vector.broadcast %225 : vector<2x8x1xf32> to vector<2x8x8xf32>
    %227 = arith.mulf %222, %226 : vector<2x8x8xf32>
    "tpu.trace_start"() <{level = 10 : i32, message = "tlm,tme->tle"}> : () -> ()
    %cst_66 = arith.constant dense<0.000000e+00> : vector<2x8x32xf32>
    %228 = tpu.matmul %227, %212, %cst_66 {dimension_numbers = #tpu.dot_dimension_numbers<[2], [1], [1], [2], [0, 0, 0, 1, 1, 2], [0], [0]>} : vector<2x8x8xf32>, vector<2x8x32xf32>, vector<2x8x32xf32> -> vector<2x8x32xf32>
    "tpu.trace_stop"() : () -> ()
    %229 = arith.addf %199, %228 : vector<2x8x32xf32>
    %c28_i32_67 = arith.constant 28 : i32
    %230 = vector.broadcast %c28_i32_67 : i32 to vector<1x1x32xi32>
    %231 = arith.cmpi sge, %18, %230 : vector<1x1x32xi32>
    %c32_i32 = arith.constant 32 : i32
    %232 = vector.broadcast %c32_i32 : i32 to vector<1x1x32xi32>
    %233 = arith.cmpi slt, %18, %232 : vector<1x1x32xi32>
    %234 = arith.andi %231, %233 : vector<1x1x32xi1>
    %cst_68 = arith.constant 0.000000e+00 : f32
    %235 = vector.shape_cast %234 : vector<1x1x32xi1> to vector<1x1x32xi1>
    %236 = vector.broadcast %235 : vector<1x1x32xi1> to vector<2x8x32xi1>
    %237 = vector.broadcast %cst_68 : f32 to vector<2x8x32xf32>
    %238 = arith.select %236, %9, %237 : vector<2x8x32xi1>, vector<2x8x32xf32>
    %cst_69 = arith.constant 0.000000e+00 : f32
    %239 = vector.shape_cast %234 : vector<1x1x32xi1> to vector<1x1x32xi1>
    %240 = vector.broadcast %239 : vector<1x1x32xi1> to vector<2x8x32xi1>
    %241 = vector.broadcast %cst_69 : f32 to vector<2x8x32xf32>
    %242 = arith.select %240, %11, %241 : vector<2x8x32xi1>, vector<2x8x32xf32>
    "tpu.trace_start"() <{level = 10 : i32, message = "tle,tme->tlm"}> : () -> ()
    %cst_70 = arith.constant dense<0.000000e+00> : vector<2x8x8xf32>
    %243 = tpu.matmul %238, %10, %cst_70 {dimension_numbers = #tpu.dot_dimension_numbers<[2], [2], [1], [1], [0, 0, 0, 1, 1, 1], [0], [0]>} : vector<2x8x32xf32>, vector<2x8x32xf32>, vector<2x8x8xf32> -> vector<2x8x8xf32>
    "tpu.trace_stop"() : () -> ()
    %cst_71 = arith.constant 5.000000e-01 : f32
    %244 = vector.broadcast %cst_71 : f32 to vector<2x8x8xf32>
    %245 = arith.mulf %243, %244 : vector<2x8x8xf32>
    %246 = vector.broadcast %17 : vector<2x1x8xf32> to vector<2x8x8xf32>
    %247 = arith.addf %245, %246 : vector<2x8x8xf32>
    %cst_72 = arith.constant dense<0xFF800000> : vector<2x8xf32>
    %248 = vector.multi_reduction <maximumf>, %247, %cst_72 [2] : vector<2x8x8xf32> to vector<2x8xf32>
    %249 = vector.shape_cast %248 : vector<2x8xf32> to vector<2x8x1xf32>
    %250 = vector.broadcast %249 : vector<2x8x1xf32> to vector<2x8x8xf32>
    %251 = arith.subf %247, %250 : vector<2x8x8xf32>
    %252 = math.exp %251 : vector<2x8x8xf32>
    %cst_73 = arith.constant dense<0.000000e+00> : vector<2x8xf32>
    %253 = vector.multi_reduction <add>, %252, %cst_73 [2] : vector<2x8x8xf32> to vector<2x8xf32>
    %254 = vector.shape_cast %253 : vector<2x8xf32> to vector<2x8x1xf32>
    %255 = tpu.reciprocal %254 {approx = true} : vector<2x8x1xf32> -> vector<2x8x1xf32>
    %256 = vector.broadcast %255 : vector<2x8x1xf32> to vector<2x8x8xf32>
    %257 = arith.mulf %252, %256 : vector<2x8x8xf32>
    "tpu.trace_start"() <{level = 10 : i32, message = "tlm,tme->tle"}> : () -> ()
    %cst_74 = arith.constant dense<0.000000e+00> : vector<2x8x32xf32>
    %258 = tpu.matmul %257, %242, %cst_74 {dimension_numbers = #tpu.dot_dimension_numbers<[2], [1], [1], [2], [0, 0, 0, 1, 1, 2], [0], [0]>} : vector<2x8x8xf32>, vector<2x8x32xf32>, vector<2x8x32xf32> -> vector<2x8x32xf32>
    "tpu.trace_stop"() : () -> ()
    %259 = arith.addf %229, %258 : vector<2x8x32xf32>
    %260 = vector.shape_cast %259 : vector<2x8x32xf32> to vector<16x32xf32>
    %c0_75 = arith.constant 0 : index
    %c0_76 = arith.constant 0 : index
    %261 = vector.load %arg5[%c0_75, %c0_76] : memref<32x32xf32, #tpu.memory_space<vmem>>, vector<32x32xf32>
    %cst_77 = arith.constant dense<0.000000e+00> : vector<16x32xf32>
    %262 = tpu.matmul %260, %261, %cst_77 {dimension_numbers = #tpu.dot_dimension_numbers<[1], [0], [0], [1], [0, 0, 1, 1], [], []>} : vector<16x32xf32>, vector<32x32xf32>, vector<16x32xf32> -> vector<16x32xf32>
    %c0_78 = arith.constant 0 : index
    %c0_79 = arith.constant 0 : index
    %263 = vector.load %arg6[%c0_78, %c0_79] : memref<1x32xf32, #tpu.memory_space<vmem>>, vector<1x32xf32>
    %264 = vector.broadcast %263 : vector<1x32xf32> to vector<16x32xf32>
    %265 = arith.addf %262, %264 : vector<16x32xf32>
    %c0_80 = arith.constant 0 : index
    %c0_81 = arith.constant 0 : index
    %266 = vector.load %arg7[%c0_80, %c0_81] : memref<32x128xf32, #tpu.memory_space<vmem>>, vector<32x128xf32>
    %cst_82 = arith.constant dense<0.000000e+00> : vector<16x128xf32>
    %267 = tpu.matmul %265, %266, %cst_82 {dimension_numbers = #tpu.dot_dimension_numbers<[1], [0], [0], [1], [0, 0, 1, 1], [], []>} : vector<16x32xf32>, vector<32x128xf32>, vector<16x128xf32> -> vector<16x128xf32>
    %c0_83 = arith.constant 0 : index
    %c0_84 = arith.constant 0 : index
    %268 = vector.load %arg8[%c0_83, %c0_84] : memref<1x128xf32, #tpu.memory_space<vmem>>, vector<1x128xf32>
    %269 = vector.broadcast %268 : vector<1x128xf32> to vector<16x128xf32>
    %270 = arith.addf %267, %269 : vector<16x128xf32>
    %271 = math.tanh %270 : vector<16x128xf32>
    %272 = vector.shape_cast %271 : vector<16x128xf32> to vector<2x8x128xf32>
    %c0_85 = arith.constant 0 : index
    %c0_86 = arith.constant 0 : index
    %273 = vector.load %arg9[%c0_85, %c0_86] : memref<1x128xf32, #tpu.memory_space<vmem>>, vector<1x128xf32>
    %274 = vector.shape_cast %273 : vector<1x128xf32> to vector<1x1x128xf32>
    %275 = vector.broadcast %274 : vector<1x1x128xf32> to vector<2x8x128xf32>
    %276 = arith.mulf %272, %275 : vector<2x8x128xf32>
    %cst_87 = arith.constant dense<0.000000e+00> : vector<2x8xf32>
    %277 = vector.multi_reduction <add>, %276, %cst_87 [2] : vector<2x8x128xf32> to vector<2x8xf32>
    %c0_88 = arith.constant 0 : index
    %c0_89 = arith.constant 0 : index
    %278 = memref.load %arg10[%c0_88, %c0_89] : memref<1x1xf32, #tpu.memory_space<smem>>
    %279 = vector.broadcast %278 : f32 to vector<2x8xf32>
    %280 = arith.addf %277, %279 : vector<2x8xf32>
    %cst_90 = arith.constant 0.000000e+00 : f32
    %281 = vector.broadcast %cst_90 : f32 to vector<2x8xf32>
    %282 = arith.subf %281, %280 : vector<2x8xf32>
    %283 = math.exp %282 : vector<2x8xf32>
    %cst_91 = arith.constant 1.000000e+00 : f32
    %284 = vector.broadcast %cst_91 : f32 to vector<2x8xf32>
    %285 = arith.addf %284, %283 : vector<2x8xf32>
    %286 = tpu.reciprocal %285 {approx = true} : vector<2x8xf32> -> vector<2x8xf32>
    %287 = arith.mulf %286, %1 : vector<2x8xf32>
    %cst_92 = arith.constant dense<0.000000e+00> : vector<2xf32>
    %288 = vector.multi_reduction <add>, %287, %cst_92 [1] : vector<2x8xf32> to vector<2xf32>
    %289 = vector.shape_cast %288 : vector<2xf32> to vector<2x1xf32>
    %cst_93 = arith.constant 9.99999971E-10 : f32
    %290 = vector.broadcast %cst_93 : f32 to vector<2x1xf32>
    %291 = arith.addf %289, %290 : vector<2x1xf32>
    %292 = tpu.reciprocal %291 {approx = true} : vector<2x1xf32> -> vector<2x1xf32>
    %293 = vector.broadcast %292 : vector<2x1xf32> to vector<2x8xf32>
    %294 = arith.mulf %287, %293 : vector<2x8xf32>
    %295 = vector.shape_cast %265 : vector<16x32xf32> to vector<2x8x32xf32>
    %296 = vector.shape_cast %294 : vector<2x8xf32> to vector<2x1x8xf32>
    "tpu.trace_start"() <{level = 10 : i32, message = "tql,tle->tqe"}> : () -> ()
    %cst_94 = arith.constant dense<0.000000e+00> : vector<2x1x32xf32>
    %297 = tpu.matmul %296, %295, %cst_94 {dimension_numbers = #tpu.dot_dimension_numbers<[2], [1], [1], [2], [0, 0, 0, 1, 1, 2], [0], [0]>} : vector<2x1x8xf32>, vector<2x8x32xf32>, vector<2x1x32xf32> -> vector<2x1x32xf32>
    "tpu.trace_stop"() : () -> ()
    %298 = vector.shape_cast %297 : vector<2x1x32xf32> to vector<2x32xf32>
    %c0_95 = arith.constant 0 : index
    %c0_96 = arith.constant 0 : index
    %299 = vector.load %arg11[%c0_95, %c0_96] : memref<2x32xf32, #tpu.memory_space<vmem>>, vector<2x32xf32>
    tpu.vector_store %arg11[%c0_95, %c0_96], %298 {strides = array<i32>} : memref<2x32xf32, #tpu.memory_space<vmem>>, vector<2x32xf32>,
    %c0_97 = arith.constant 0 : index
    %c0_98 = arith.constant 0 : index
    %300 = vector.load %arg12[%c0_97, %c0_98] : memref<2x8xf32, #tpu.memory_space<vmem>>, vector<2x8xf32>
    tpu.vector_store %arg12[%c0_97, %c0_98], %294 {strides = array<i32>} : memref<2x8xf32, #tpu.memory_space<vmem>>, vector<2x8xf32>,
    return
  }
  func.func @transform_0(%arg0: i32) -> (i32, i32, i32) {
    %c0_i32 = arith.constant 0 : i32
    %c0_i32_0 = arith.constant 0 : i32
    %c0_i32_1 = arith.constant 0 : i32
    return %arg0, %c0_i32, %c0_i32_0 : i32, i32, i32
  }
  func.func @transform_1(%arg0: i32) -> (i32, i32) {
    %c0_i32 = arith.constant 0 : i32
    %c0_i32_0 = arith.constant 0 : i32
    return %arg0, %c0_i32 : i32, i32
  }
  func.func @transform_2(%arg0: i32) -> (i32, i32) {
    %c0_i32 = arith.constant 0 : i32
    %c0_i32_0 = arith.constant 0 : i32
    %c0_i32_1 = arith.constant 0 : i32
    return %c0_i32, %c0_i32_0 : i32, i32
  }
  func.func @transform_3(%arg0: i32) -> (i32, i32) {
    %c0_i32 = arith.constant 0 : i32
    %c0_i32_0 = arith.constant 0 : i32
    %c0_i32_1 = arith.constant 0 : i32
    return %c0_i32, %c0_i32_0 : i32, i32
  }
  func.func @transform_4(%arg0: i32) -> (i32, i32) {
    %c0_i32 = arith.constant 0 : i32
    %c0_i32_0 = arith.constant 0 : i32
    %c0_i32_1 = arith.constant 0 : i32
    return %c0_i32, %c0_i32_0 : i32, i32
  }
  func.func @transform_5(%arg0: i32) -> (i32, i32) {
    %c0_i32 = arith.constant 0 : i32
    %c0_i32_0 = arith.constant 0 : i32
    %c0_i32_1 = arith.constant 0 : i32
    return %c0_i32, %c0_i32_0 : i32, i32
  }
  func.func @transform_6(%arg0: i32) -> (i32, i32) {
    %c0_i32 = arith.constant 0 : i32
    %c0_i32_0 = arith.constant 0 : i32
    %c0_i32_1 = arith.constant 0 : i32
    return %c0_i32, %c0_i32_0 : i32, i32
  }
  func.func @transform_7(%arg0: i32) -> (i32, i32) {
    %c0_i32 = arith.constant 0 : i32
    %c0_i32_0 = arith.constant 0 : i32
    %c0_i32_1 = arith.constant 0 : i32
    return %c0_i32, %c0_i32_0 : i32, i32
  }
  func.func @transform_8(%arg0: i32) -> (i32, i32) {
    %c0_i32 = arith.constant 0 : i32
    %c0_i32_0 = arith.constant 0 : i32
    %c0_i32_1 = arith.constant 0 : i32
    return %c0_i32, %c0_i32_0 : i32, i32
  }
  func.func @transform_9(%arg0: i32) -> (i32, i32) {
    %c0_i32 = arith.constant 0 : i32
    %c0_i32_0 = arith.constant 0 : i32
    %c0_i32_1 = arith.constant 0 : i32
    return %c0_i32, %c0_i32_0 : i32, i32
  }
  func.func @transform_10(%arg0: i32) -> (i32, i32) {
    %c0_i32 = arith.constant 0 : i32
    %c0_i32_0 = arith.constant 0 : i32
    return %arg0, %c0_i32 : i32, i32
  }
  func.func @transform_11(%arg0: i32) -> (i32, i32) {
    %c0_i32 = arith.constant 0 : i32
    %c0_i32_0 = arith.constant 0 : i32
    return %arg0, %c0_i32 : i32, i32
  }
}

</mosaic_0001>

<llo_original>
// kernel: tpu_custom_call.1
$region0: #{tpu_custom_call.1}
  #allocation0 [shape = 'u32[]', space=smem, size = 0x4, offset = 0x4, fixed_abs, tag = 'smem constant byte address 0x4 - core index']
  #allocation1 [shape = 'u32[72,128]{1,0:T(1,128)}', space=vmem, size = 0x9000, scoped, tag = 'internal scratch']
  #allocation2 [shape = 'f32[1,1]{1,0:T(1,128)S(6)}', space=smem, size = 0x200, scoped, tag = 'scoped memory for tpu_custom_call.1']
  %s0 = inlined_call_operand.hbm [shape: f32[2,8,32], index: 0, kind: input, shape index: {}]
  %s1 = inlined_call_operand.vmem [shape: f32[2,8], index: 1, kind: input, shape index: {}]
  %s2 = inlined_call_operand.hbm [shape: f32[32,96], index: 2, kind: input, shape index: {}]
  %s3 = inlined_call_operand.vmem [shape: f32[1,96], index: 3, kind: input, shape index: {}]
  %s4 = inlined_call_operand.hbm [shape: f32[32,32], index: 4, kind: input, shape index: {}]
  %s5 = inlined_call_operand.vmem [shape: f32[1,32], index: 5, kind: input, shape index: {}]
  %s6 = inlined_call_operand.hbm [shape: f32[32,128], index: 6, kind: input, shape index: {}]
  %s7 = inlined_call_operand.vmem [shape: f32[1,128], index: 7, kind: input, shape index: {}]
  %s8 = inlined_call_operand.vmem [shape: f32[1,128], index: 8, kind: input, shape index: {}]
  %s9 = inlined_call_operand.<no memory space> [shape: f32[1,1], index: 9, kind: input, shape index: {}]
  %s10 = inlined_call_operand.hbm [shape: f32[2,32], index: 10, kind: output, shape index: {0}]
  %s11 = inlined_call_operand.hbm [shape: f32[2,8], index: 11, kind: output, shape index: {1}]
  %12 = xla_tuple %s10, %s11
  %s13 = sld [smem:[#allocation0]]
  $region74: #{tpu_custom_call.1} parent=0
    _
  %s15 = ssub.s32 1, %s13
  %s16 = scalar_select 0, %s15, %s13
  %17 = sst [smem:[#allocation2]] %s9
  $region1: #{tpu_custom_call.1} parent=0
    #allocation3 [shape = 'u8[8192]{0}', space=vmem, size = 0x2000, scoped, tag = 'input window, operand 0, single buffered']
    #allocation4 [shape = 's32[1]{0}', space=sflag, size = 0x4, scoped, tag = 'scoped memory for tpu_custom_call.1']
    #allocation5 [shape = 's32[1]{0}', space=sflag, size = 0x4, scoped, tag = 'scoped memory for tpu_custom_call.1']
    #allocation6 [shape = 'u8[16384]{0}', space=vmem, size = 0x4000, scoped, tag = 'input window, operand 2, single buffered']
    #allocation7 [shape = 's32[1]{0}', space=sflag, size = 0x4, scoped, tag = 'scoped memory for tpu_custom_call.1']
    #allocation8 [shape = 'u8[16384]{0}', space=vmem, size = 0x4000, scoped, tag = 'input window, operand 4, single buffered']
    #allocation9 [shape = 'u8[16384]{0}', space=vmem, size = 0x4000, scoped, tag = 'input window, operand 6, single buffered']
    #allocation10 [shape = 's32[1]{0}', space=sflag, size = 0x4, scoped, tag = 'scoped memory for tpu_custom_call.1']
    #allocation11 [shape = 'u8[1024]{0}', space=vmem, size = 0x400, scoped, tag = 'output window, operand 0, single buffered']
    #allocation12 [shape = 'u8[1024]{0}', space=vmem, size = 0x400, scoped, tag = 'output window, operand 1, single buffered']
    #allocation13 [shape = 's32[1]{0}', space=sflag, size = 0x4, scoped, tag = 'scoped memory for tpu_custom_call.1']
    %18 = vsyncpa [#allocation4], 0
    %19 = vsyncpa [#allocation7], 0
    %20 = vsyncpa [#allocation10], 0
    %21 = vsyncpa [#allocation5], 0
    %22 = vsyncpa [#allocation13], 0
    // Predicated region
    $region2: #{tpu_custom_call.1} parent=1 // pred_check
      _
    $region3: #{tpu_custom_call.1} parent=1 // pred_check_branch
      %24 = sbr.rel (0) target = $region5
    $region4: #{tpu_custom_call.1} parent=1 // pred_region
      %26 = vsyncadd [#allocation4], 0
      %s27 = sshll.u32 %s0, 4
      %s28 = int_to_ptr.hbm [resolvable:$true] %s27
      %s29 = sshll.u32 [#allocation3], 4
      %s30 = int_to_ptr.vmem [resolvable:$true] %s29
      %35 = dma.hbm_to_vmem [thread:$0]  %s28, 256, %s30, [#allocation4], 128, 128, 8
    $region5: #{tpu_custom_call.1} parent=1 // pred_fallthru
      _
    // Predicated region
    $region6: #{tpu_custom_call.1} parent=1 // pred_check
      _
    $region7: #{tpu_custom_call.1} parent=1 // pred_check_branch
      %37 = sbr.rel (0) target = $region9
    $region8: #{tpu_custom_call.1} parent=1 // pred_region
      _
    $region9: #{tpu_custom_call.1} parent=1 // pred_fallthru
      _
    // Predicated region
    $region10: #{tpu_custom_call.1} parent=1 // pred_check
      _
    $region11: #{tpu_custom_call.1} parent=1 // pred_check_branch
      %39 = sbr.rel (0) target = $region13
    $region12: #{tpu_custom_call.1} parent=1 // pred_region
      %41 = vsyncadd [#allocation7], 0
      %s42 = sshll.u32 %s2, 4
      %s43 = int_to_ptr.hbm [resolvable:$true] %s42
      %s44 = sshll.u32 [#allocation6], 4
      %s45 = int_to_ptr.vmem [resolvable:$true] %s44
      %50 = dma.hbm_to_vmem [thread:$0]  %s43, 512, %s45, [#allocation7], 128, 128, 8
    $region13: #{tpu_custom_call.1} parent=1 // pred_fallthru
      _
    // Predicated region
    $region14: #{tpu_custom_call.1} parent=1 // pred_check
      _
    $region15: #{tpu_custom_call.1} parent=1 // pred_check_branch
      %52 = sbr.rel (0) target = $region17
    $region16: #{tpu_custom_call.1} parent=1 // pred_region
      _
    $region17: #{tpu_custom_call.1} parent=1 // pred_fallthru
      _
    // Predicated region
    $region18: #{tpu_custom_call.1} parent=1 // pred_check
      _
    $region19: #{tpu_custom_call.1} parent=1 // pred_check_branch
      %54 = sbr.rel (0) target = $region21
    $region20: #{tpu_custom_call.1} parent=1 // pred_region
      %56 = vsyncadd [#allocation7], 0
      %s57 = sshll.u32 %s4, 4
      %s58 = int_to_ptr.hbm [resolvable:$true] %s57
      %s59 = sshll.u32 [#allocation8], 4
      %s60 = int_to_ptr.vmem [resolvable:$true] %s59
      %65 = dma.hbm_to_vmem [thread:$0]  %s58, 512, %s60, [#allocation7], 128, 128, 8
    $region21: #{tpu_custom_call.1} parent=1 // pred_fallthru
      _
    // Predicated region
    $region22: #{tpu_custom_call.1} parent=1 // pred_check
      _
    $region23: #{tpu_custom_call.1} parent=1 // pred_check_branch
      %67 = sbr.rel (0) target = $region25
    $region24: #{tpu_custom_call.1} parent=1 // pred_region
      _
    $region25: #{tpu_custom_call.1} parent=1 // pred_fallthru
      _
    // Predicated region
    $region26: #{tpu_custom_call.1} parent=1 // pred_check
      _
    $region27: #{tpu_custom_call.1} parent=1 // pred_check_branch
      %69 = sbr.rel (0) target = $region29
    $region28: #{tpu_custom_call.1} parent=1 // pred_region
      %71 = vsyncadd [#allocation10], 0
      %s72 = sshll.u32 %s6, 4
      %s73 = int_to_ptr.hbm [resolvable:$true] %s72
      %s74 = sshll.u32 [#allocation9], 4
      %s75 = int_to_ptr.vmem [resolvable:$true] %s74
      %80 = dma.hbm_to_vmem [thread:$0]  %s73, 512, %s75, [#allocation10], 128, 128, 8
    $region29: #{tpu_custom_call.1} parent=1 // pred_fallthru
      _
    // Predicated region
    $region30: #{tpu_custom_call.1} parent=1 // pred_check
      _
    $region31: #{tpu_custom_call.1} parent=1 // pred_check_branch
      %82 = sbr.rel (0) target = $region33
    $region32: #{tpu_custom_call.1} parent=1 // pred_region
      _
    $region33: #{tpu_custom_call.1} parent=1 // pred_fallthru
      _
    // Predicated region
    $region34: #{tpu_custom_call.1} parent=1 // pred_check
      _
    $region35: #{tpu_custom_call.1} parent=1 // pred_check_branch
      %84 = sbr.rel (0) target = $region37
    $region36: #{tpu_custom_call.1} parent=1 // pred_region
      _
    $region37: #{tpu_custom_call.1} parent=1 // pred_fallthru
      _
    // Predicated region
    $region38: #{tpu_custom_call.1} parent=1 // pred_check
      _
    $region39: #{tpu_custom_call.1} parent=1 // pred_check_branch
      %86 = sbr.rel (0) target = $region41
    $region40: #{tpu_custom_call.1} parent=1 // pred_region
      _
    $region41: #{tpu_custom_call.1} parent=1 // pred_fallthru
      _
    // Predicated region
    $region42: #{tpu_custom_call.1} parent=1 // pred_check
      _
    $region43: #{tpu_custom_call.1} parent=1 // pred_check_branch
      %88 = sbr.rel (0) target = $region45
    $region44: #{tpu_custom_call.1} parent=1 // pred_region
      %90 = dma.done [#allocation4], 256
    $region45: #{tpu_custom_call.1} parent=1 // pred_fallthru
      _
    // Predicated region
    $region46: #{tpu_custom_call.1} parent=1 // pred_check
      _
    $region47: #{tpu_custom_call.1} parent=1 // pred_check_branch
      %92 = sbr.rel (0) target = $region49
    $region48: #{tpu_custom_call.1} parent=1 // pred_region
      %94 = dma.done [#allocation7], 512
    $region49: #{tpu_custom_call.1} parent=1 // pred_fallthru
      _
    // Predicated region
    $region50: #{tpu_custom_call.1} parent=1 // pred_check
      _
    $region51: #{tpu_custom_call.1} parent=1 // pred_check_branch
      %96 = sbr.rel (0) target = $region53
    $region52: #{tpu_custom_call.1} parent=1 // pred_region
      %98 = dma.done [#allocation7], 512
    $region53: #{tpu_custom_call.1} parent=1 // pred_fallthru
      _
    // Predicated region
    $region54: #{tpu_custom_call.1} parent=1 // pred_check
      _
    $region55: #{tpu_custom_call.1} parent=1 // pred_check_branch
      %100 = sbr.rel (0) target = $region57
    $region56: #{tpu_custom_call.1} parent=1 // pred_region
      %102 = dma.done [#allocation10], 512
    $region57: #{tpu_custom_call.1} parent=1 // pred_fallthru
      _
    %v103 = vld [vmem:[#allocation3] sm:$0xff]
    %v104 = vld [vmem:[#allocation3 + $0x8] sm:$0xff]
    %v105 = vld [vmem:[%s1] sm:$0x3]
    %v106 = vld [vmem:[#allocation6] sm:$0xff]
    %v107 = vld [vmem:[#allocation6 + $0x8] sm:$0xff]
    %v108 = vld [vmem:[#allocation6 + $0x10] sm:$0xff]
    %v109 = vld [vmem:[#allocation6 + $0x18] sm:$0xff]
    %v110 = vld [vmem:[%s3] sm:$0x1]
    %v112 = vperm.slane %v110, 0
    %vm114 = vcmask 261120
    %v116 = vsel %vm114, %v103, 0
    %v119 = vsel %vm114, %v104, 0
    %121 = vmatpush.msra.mxu0 0.0
    %122 = vmatpush.msra.mxu0 0.0
    %123 = vmatpush.msra.mxu0 0.0
    %124 = vmatpush.msra.mxu0 0.0
    %125 = vmatpush.msra.mxu0 0.0
    %126 = vmatpush.msra.mxu0 0.0
    %127 = vmatpush.msra.mxu0 0.0
    %128 = vmatpush.msra.mxu0 0.0
    %129 = vmatpush.msra.mxu0 0.0
    %130 = vmatpush.msra.mxu0 0.0
    %131 = vmatpush.msra.mxu0 0.0
    %132 = vmatpush.msra.mxu0 0.0
    %133 = vmatpush.msra.mxu0 %v109
    %134 = vmatpush.msra.mxu0 %v108
    %135 = vmatpush.msra.mxu0 %v107
    %136 = vmatpush.msra.mxu0 %v106
    %137 = vmatmul.f32.gmra.mxu0 %v116
    %v138 = vpop.f32.mrf.mxu0
    %v139 = vadd.f32 %v112, %v138
    %140 = vmatmul.f32.gmra.mxu0 %v119
    %v141 = vpop.f32.mrf.mxu0
    %v142 = vadd.f32 %v112, %v141
    %143 = vdwg.mxu0
    %v145 = vrot.slane %v105, 1
    %vm147 = vcmp.gt.f32.partialorder %v105, 0.5
    %vm148 = vcmp.gt.f32.partialorder %v145, 0.5
    %v149 = vsel %vm147, 0.0, -1e+30
    %v150 = vsel %vm148, 0.0, -1e+30
    %v151 = vlaneseq
    %v152 = vand.u32 %v151, 127
    %vm153 = vcmp.ge.s32.totalorder %v152, 0
    %vm154 = vcmp.lt.s32.totalorder %v152, 4
    %vm155 = vmand %vm153, %vm154
    %v156 = vsel %vm155, 1, 0
    %vm157 = vcmp.eq.s32.totalorder %v156, 1
    %v158 = vsel %vm157, %v139, 0.0
    %v159 = vsel %vm157, %v142, 0.0
    %162 = vrot.lane.b32.xlu0 %v139, 64
    %v163 = vpop.permute.xlu0 %162
    %164 = vrot.lane.b32.xlu0 %v142, 64
    %v165 = vpop.permute.xlu0 %164
    %v168 = vsel %vm157, %v163, 0.0
    %v169 = vsel %vm157, %v165, 0.0
    %170 = vrot.lane.b32.xlu0 %v139, 96
    %v171 = vpop.permute.xlu0 %170
    %v173 = vsel %vm114, %v158, 0
    %v175 = vsel %vm114, %v171, 0
    %177 = vmatpush.xpose.msra.mxu0 0.0
    %178 = vmatpush.xpose.msra.mxu0 0.0
    %179 = vmatpush.xpose.msra.mxu0 0.0
    %180 = vmatpush.xpose.msra.mxu0 0.0
    %181 = vmatpush.xpose.msra.mxu0 0.0
    %182 = vmatpush.xpose.msra.mxu0 0.0
    %183 = vmatpush.xpose.msra.mxu0 0.0
    %184 = vmatpush.xpose.msra.mxu0 0.0
    %185 = vmatpush.xpose.msra.mxu0 0.0
    %186 = vmatpush.xpose.msra.mxu0 0.0
    %187 = vmatpush.xpose.msra.mxu0 0.0
    %188 = vmatpush.xpose.msra.mxu0 0.0
    %189 = vmatpush.xpose.msra.mxu0 0.0
    %190 = vmatpush.xpose.msra.mxu0 0.0
    %191 = vmatpush.xpose.msra.mxu0 0.0
    %192 = vmatpush.xpose.msra.mxu0 %v175
    %193 = vmatmul.f32.gmra.mxu0 %v173
    %v194 = vpop.f32.mrf.mxu0
    %v195 = vadd.f32 0.0, %v194
    %196 = vdwg.mxu0
    %197 = vrot.lane.b32.xlu0 %v142, 96
    %v198 = vpop.permute.xlu0 %197
    %v200 = vsel %vm114, %v159, 0
    %v202 = vsel %vm114, %v198, 0
    %204 = vmatpush.xpose.msra.mxu0 0.0
    %205 = vmatpush.xpose.msra.mxu0 0.0
    %206 = vmatpush.xpose.msra.mxu0 0.0
    %207 = vmatpush.xpose.msra.mxu0 0.0
    %208 = vmatpush.xpose.msra.mxu0 0.0
    %209 = vmatpush.xpose.msra.mxu0 0.0
    %210 = vmatpush.xpose.msra.mxu0 0.0
    %211 = vmatpush.xpose.msra.mxu0 0.0
    %212 = vmatpush.xpose.msra.mxu0 0.0
    %213 = vmatpush.xpose.msra.mxu0 0.0
    %214 = vmatpush.xpose.msra.mxu0 0.0
    %215 = vmatpush.xpose.msra.mxu0 0.0
    %216 = vmatpush.xpose.msra.mxu0 0.0
    %217 = vmatpush.xpose.msra.mxu0 0.0
    %218 = vmatpush.xpose.msra.mxu0 0.0
    %219 = vmatpush.xpose.msra.mxu0 %v202
    %220 = vmatmul.f32.gmra.mxu0 %v200
    %v221 = vpop.f32.mrf.mxu0
    %v222 = vadd.f32 0.0, %v221
    %223 = vdwg.mxu0
    %v224 = vmul.f32 %v195, 0.5
    %v225 = vmul.f32 %v222, 0.5
    %v228 = vperm.slane %v149, 0
    %v229 = vperm.slane %v150, 0
    %v232 = vadd.f32 %v224, %v228
    %v233 = vadd.f32 %v225, %v229
    %vm234 = vcmask 64512
    %v235 = vsel %vm234, %v232, -inf
    %236 = vmax.xlane.f32.xlu0 %v235
    %v237 = vpop.xlane.xlu0 %236
    %v238 = vsel %vm234, %v233, -inf
    %239 = vmax.xlane.f32.xlu0 %v238
    %v240 = vpop.xlane.xlu0 %239
    %v241 = vsub.f32 %v232, %v237
    %v242 = vsub.f32 %v233, %v240
    %v243 = vmul.f32 %v241, 1.442695
    %v244 = vpow.pop %v243
    %v245 = vmul.f32 %v242, 1.442695
    %v246 = vpow.pop %v245
    %v247 = vsel %vm234, %v244, 0.0
    %248 = vadd.xlane.f32.xlu0 %v247
    %v249 = vpop.xlane.xlu0 %248
    %v250 = vsel %vm234, %v246, 0.0
    %251 = vadd.xlane.f32.xlu0 %v250
    %v252 = vpop.xlane.xlu0 %251
    %v253 = vrcp.pop %v249
    %v254 = vrcp.pop %v252
    %v255 = vmul.f32 %v244, %v253
    %v256 = vmul.f32 %v246, %v254
    %vm257 = vcmp.ge.s32.totalorder %v152, 4
    %vm258 = vcmp.lt.s32.totalorder %v152, 8
    %vm259 = vmand %vm257, %vm258
    %v260 = vsel %vm259, 1, 0
    %vm261 = vcmp.eq.s32.totalorder %v260, 1
    %v262 = vsel %vm261, %v139, 0.0
    %v263 = vsel %vm261, %v142, 0.0
    %v264 = vsel %vm261, %v163, 0.0
    %v265 = vsel %vm261, %v165, 0.0
    %v267 = vsel %vm114, %v262, 0
    %269 = vmatpush.xpose.msra.mxu0 0.0
    %270 = vmatpush.xpose.msra.mxu0 0.0
    %271 = vmatpush.xpose.msra.mxu0 0.0
    %272 = vmatpush.xpose.msra.mxu0 0.0
    %273 = vmatpush.xpose.msra.mxu0 0.0
    %274 = vmatpush.xpose.msra.mxu0 0.0
    %275 = vmatpush.xpose.msra.mxu0 0.0
    %276 = vmatpush.xpose.msra.mxu0 0.0
    %277 = vmatpush.xpose.msra.mxu0 0.0
    %278 = vmatpush.xpose.msra.mxu0 0.0
    %279 = vmatpush.xpose.msra.mxu0 0.0
    %280 = vmatpush.xpose.msra.mxu0 0.0
    %281 = vmatpush.xpose.msra.mxu0 0.0
    %282 = vmatpush.xpose.msra.mxu0 0.0
    %283 = vmatpush.xpose.msra.mxu0 0.0
    %284 = vmatpush.xpose.msra.mxu0 %v175
    %285 = vmatmul.f32.gmra.mxu0 %v267
    %v286 = vpop.f32.mrf.mxu0
    %v287 = vadd.f32 0.0, %v286
    %288 = vdwg.mxu0
    %v290 = vsel %vm114, %v263, 0
    %292 = vmatpush.xpose.msra.mxu0 0.0
    %293 = vmatpush.xpose.msra.mxu0 0.0
    %294 = vmatpush.xpose.msra.mxu0 0.0
    %295 = vmatpush.xpose.msra.mxu0 0.0
    %296 = vmatpush.xpose.msra.mxu0 0.0
    %297 = vmatpush.xpose.msra.mxu0 0.0
    %298 = vmatpush.xpose.msra.mxu0 0.0
    %299 = vmatpush.xpose.msra.mxu0 0.0
    %300 = vmatpush.xpose.msra.mxu0 0.0
    %301 = vmatpush.xpose.msra.mxu0 0.0
    %302 = vmatpush.xpose.msra.mxu0 0.0
    %303 = vmatpush.xpose.msra.mxu0 0.0
    %304 = vmatpush.xpose.msra.mxu0 0.0
    %305 = vmatpush.xpose.msra.mxu0 0.0
    %306 = vmatpush.xpose.msra.mxu0 0.0
    %307 = vmatpush.xpose.msra.mxu0 %v202
    %308 = vmatmul.f32.gmra.mxu0 %v290
    %v309 = vpop.f32.mrf.mxu0
    %v310 = vadd.f32 0.0, %v309
    %311 = vdwg.mxu0
    %v312 = vmul.f32 %v287, 0.5
    %v313 = vmul.f32 %v310, 0.5
    %v314 = vadd.f32 %v312, %v228
    %v315 = vadd.f32 %v313, %v229
    %v316 = vsel %vm234, %v314, -inf
    %317 = vmax.xlane.f32.xlu0 %v316
    %v318 = vpop.xlane.xlu0 %317
    %v319 = vsel %vm234, %v315, -inf
    %320 = vmax.xlane.f32.xlu0 %v319
    %v321 = vpop.xlane.xlu0 %320
    %v322 = vsub.f32 %v314, %v318
    %v323 = vsub.f32 %v315, %v321
    %v324 = vmul.f32 %v322, 1.442695
    %v325 = vpow.pop %v324
    %v326 = vmul.f32 %v323, 1.442695
    %v327 = vpow.pop %v326
    %v328 = vsel %vm234, %v325, 0.0
    %329 = vadd.xlane.f32.xlu0 %v328
    %v330 = vpop.xlane.xlu0 %329
    %v331 = vsel %vm234, %v327, 0.0
    %332 = vadd.xlane.f32.xlu0 %v331
    %v333 = vpop.xlane.xlu0 %332
    %v334 = vrcp.pop %v330
    %v335 = vrcp.pop %v333
    %v336 = vmul.f32 %v325, %v334
    %v337 = vmul.f32 %v327, %v335
    %v339 = vsel %vm234, %v336, 0
    %341 = vmatpush.msra.mxu0 0.0
    %342 = vmatpush.msra.mxu0 0.0
    %343 = vmatpush.msra.mxu0 0.0
    %344 = vmatpush.msra.mxu0 0.0
    %345 = vmatpush.msra.mxu0 0.0
    %346 = vmatpush.msra.mxu0 0.0
    %347 = vmatpush.msra.mxu0 0.0
    %348 = vmatpush.msra.mxu0 0.0
    %349 = vmatpush.msra.mxu0 0.0
    %350 = vmatpush.msra.mxu0 0.0
    %351 = vmatpush.msra.mxu0 0.0
    %352 = vmatpush.msra.mxu0 0.0
    %353 = vmatpush.msra.mxu0 0.0
    %354 = vmatpush.msra.mxu0 0.0
    %355 = vmatpush.msra.mxu0 0.0
    %356 = vmatpush.msra.mxu0 %v264
    %357 = vmatmul.f32.gmra.mxu0 %v339
    %v358 = vpop.f32.mrf.mxu0
    %v359 = vadd.f32 0.0, %v358
    %360 = vdwg.mxu0
    %v362 = vsel %vm234, %v337, 0
    %364 = vmatpush.msra.mxu0 0.0
    %365 = vmatpush.msra.mxu0 0.0
    %366 = vmatpush.msra.mxu0 0.0
    %367 = vmatpush.msra.mxu0 0.0
    %368 = vmatpush.msra.mxu0 0.0
    %369 = vmatpush.msra.mxu0 0.0
    %370 = vmatpush.msra.mxu0 0.0
    %371 = vmatpush.msra.mxu0 0.0
    %372 = vmatpush.msra.mxu0 0.0
    %373 = vmatpush.msra.mxu0 0.0
    %374 = vmatpush.msra.mxu0 0.0
    %375 = vmatpush.msra.mxu0 0.0
    %376 = vmatpush.msra.mxu0 0.0
    %377 = vmatpush.msra.mxu0 0.0
    %378 = vmatpush.msra.mxu0 0.0
    %379 = vmatpush.msra.mxu0 %v265
    %380 = vmatmul.f32.gmra.mxu0 %v362
    %v381 = vpop.f32.mrf.mxu0
    %v382 = vadd.f32 0.0, %v381
    %383 = vdwg.mxu0
    %v385 = vsel %vm234, %v255, 0
    %387 = vmatpush.msra.mxu0 0.0
    %388 = vmatpush.msra.mxu0 0.0
    %389 = vmatpush.msra.mxu0 0.0
    %390 = vmatpush.msra.mxu0 0.0
    %391 = vmatpush.msra.mxu0 0.0
    %392 = vmatpush.msra.mxu0 0.0
    %393 = vmatpush.msra.mxu0 0.0
    %394 = vmatpush.msra.mxu0 0.0
    %395 = vmatpush.msra.mxu0 0.0
    %396 = vmatpush.msra.mxu0 0.0
    %397 = vmatpush.msra.mxu0 0.0
    %398 = vmatpush.msra.mxu0 0.0
    %399 = vmatpush.msra.mxu0 0.0
    %400 = vmatpush.msra.mxu0 0.0
    %401 = vmatpush.msra.mxu0 0.0
    %402 = vmatpush.msra.mxu0 %v168
    %403 = vmatmul.f32.gmra.mxu0 %v385
    %v404 = vpop.f32.mrf.mxu0
    %v405 = vadd.f32 %v359, %v404
    %406 = vdwg.mxu0
    %v408 = vsel %vm234, %v256, 0
    %410 = vmatpush.msra.mxu0 0.0
    %411 = vmatpush.msra.mxu0 0.0
    %412 = vmatpush.msra.mxu0 0.0
    %413 = vmatpush.msra.mxu0 0.0
    %414 = vmatpush.msra.mxu0 0.0
    %415 = vmatpush.msra.mxu0 0.0
    %416 = vmatpush.msra.mxu0 0.0
    %417 = vmatpush.msra.mxu0 0.0
    %418 = vmatpush.msra.mxu0 0.0
    %419 = vmatpush.msra.mxu0 0.0
    %420 = vmatpush.msra.mxu0 0.0
    %421 = vmatpush.msra.mxu0 0.0
    %422 = vmatpush.msra.mxu0 0.0
    %423 = vmatpush.msra.mxu0 0.0
    %424 = vmatpush.msra.mxu0 0.0
    %425 = vmatpush.msra.mxu0 %v169
    %426 = vmatmul.f32.gmra.mxu0 %v408
    %v427 = vpop.f32.mrf.mxu0
    %v428 = vadd.f32 %v382, %v427
    %429 = vdwg.mxu0
    %vm430 = vcmp.ge.s32.totalorder %v152, 8
    %vm431 = vcmp.lt.s32.totalorder %v152, 12
    %vm432 = vmand %vm430, %vm431
    %v433 = vsel %vm432, 1, 0
    %vm434 = vcmp.eq.s32.totalorder %v433, 1
    %v435 = vsel %vm434, %v139, 0.0
    %v436 = vsel %vm434, %v142, 0.0
    %v437 = vsel %vm434, %v163, 0.0
    %v438 = vsel %vm434, %v165, 0.0
    %v440 = vsel %vm114, %v435, 0
    %442 = vmatpush.xpose.msra.mxu0 0.0
    %443 = vmatpush.xpose.msra.mxu0 0.0
    %444 = vmatpush.xpose.msra.mxu0 0.0
    %445 = vmatpush.xpose.msra.mxu0 0.0
    %446 = vmatpush.xpose.msra.mxu0 0.0
    %447 = vmatpush.xpose.msra.mxu0 0.0
    %448 = vmatpush.xpose.msra.mxu0 0.0
    %449 = vmatpush.xpose.msra.mxu0 0.0
    %450 = vmatpush.xpose.msra.mxu0 0.0
    %451 = vmatpush.xpose.msra.mxu0 0.0
    %452 = vmatpush.xpose.msra.mxu0 0.0
    %453 = vmatpush.xpose.msra.mxu0 0.0
    %454 = vmatpush.xpose.msra.mxu0 0.0
    %455 = vmatpush.xpose.msra.mxu0 0.0
    %456 = vmatpush.xpose.msra.mxu0 0.0
    %457 = vmatpush.xpose.msra.mxu0 %v175
    %458 = vmatmul.f32.gmra.mxu0 %v440
    %v459 = vpop.f32.mrf.mxu0
    %v460 = vadd.f32 0.0, %v459
    %461 = vdwg.mxu0
    %v463 = vsel %vm114, %v436, 0
    %465 = vmatpush.xpose.msra.mxu0 0.0
    %466 = vmatpush.xpose.msra.mxu0 0.0
    %467 = vmatpush.xpose.msra.mxu0 0.0
    %468 = vmatpush.xpose.msra.mxu0 0.0
    %469 = vmatpush.xpose.msra.mxu0 0.0
    %470 = vmatpush.xpose.msra.mxu0 0.0
    %471 = vmatpush.xpose.msra.mxu0 0.0
    %472 = vmatpush.xpose.msra.mxu0 0.0
    %473 = vmatpush.xpose.msra.mxu0 0.0
    %474 = vmatpush.xpose.msra.mxu0 0.0
    %475 = vmatpush.xpose.msra.mxu0 0.0
    %476 = vmatpush.xpose.msra.mxu0 0.0
    %477 = vmatpush.xpose.msra.mxu0 0.0
    %478 = vmatpush.xpose.msra.mxu0 0.0
    %479 = vmatpush.xpose.msra.mxu0 0.0
    %480 = vmatpush.xpose.msra.mxu0 %v202
    %481 = vmatmul.f32.gmra.mxu0 %v463
    %v482 = vpop.f32.mrf.mxu0
    %v483 = vadd.f32 0.0, %v482
    %484 = vdwg.mxu0
    %v485 = vmul.f32 %v460, 0.5
    %v486 = vmul.f32 %v483, 0.5
    %v487 = vadd.f32 %v485, %v228
    %v488 = vadd.f32 %v486, %v229
    %v489 = vsel %vm234, %v487, -inf
    %490 = vmax.xlane.f32.xlu0 %v489
    %v491 = vpop.xlane.xlu0 %490
    %v492 = vsel %vm234, %v488, -inf
    %493 = vmax.xlane.f32.xlu0 %v492
    %v494 = vpop.xlane.xlu0 %493
    %v495 = vsub.f32 %v487, %v491
    %v496 = vsub.f32 %v488, %v494
    %v497 = vmul.f32 %v495, 1.442695
    %v498 = vpow.pop %v497
    %v499 = vmul.f32 %v496, 1.442695
    %v500 = vpow.pop %v499
    %v501 = vsel %vm234, %v498, 0.0
    %502 = vadd.xlane.f32.xlu0 %v501
    %v503 = vpop.xlane.xlu0 %502
    %v504 = vsel %vm234, %v500, 0.0
    %505 = vadd.xlane.f32.xlu0 %v504
    %v506 = vpop.xlane.xlu0 %505
    %v507 = vrcp.pop %v503
    %v508 = vrcp.pop %v506
    %v509 = vmul.f32 %v498, %v507
    %v510 = vmul.f32 %v500, %v508
    %v512 = vsel %vm234, %v509, 0
    %514 = vmatpush.msra.mxu0 0.0
    %515 = vmatpush.msra.mxu0 0.0
    %516 = vmatpush.msra.mxu0 0.0
    %517 = vmatpush.msra.mxu0 0.0
    %518 = vmatpush.msra.mxu0 0.0
    %519 = vmatpush.msra.mxu0 0.0
    %520 = vmatpush.msra.mxu0 0.0
    %521 = vmatpush.msra.mxu0 0.0
    %522 = vmatpush.msra.mxu0 0.0
    %523 = vmatpush.msra.mxu0 0.0
    %524 = vmatpush.msra.mxu0 0.0
    %525 = vmatpush.msra.mxu0 0.0
    %526 = vmatpush.msra.mxu0 0.0
    %527 = vmatpush.msra.mxu0 0.0
    %528 = vmatpush.msra.mxu0 0.0
    %529 = vmatpush.msra.mxu0 %v437
    %530 = vmatmul.f32.gmra.mxu0 %v512
    %v531 = vpop.f32.mrf.mxu0
    %v532 = vadd.f32 0.0, %v531
    %533 = vdwg.mxu0
    %v535 = vsel %vm234, %v510, 0
    %537 = vmatpush.msra.mxu0 0.0
    %538 = vmatpush.msra.mxu0 0.0
    %539 = vmatpush.msra.mxu0 0.0
    %540 = vmatpush.msra.mxu0 0.0
    %541 = vmatpush.msra.mxu0 0.0
    %542 = vmatpush.msra.mxu0 0.0
    %543 = vmatpush.msra.mxu0 0.0
    %544 = vmatpush.msra.mxu0 0.0
    %545 = vmatpush.msra.mxu0 0.0
    %546 = vmatpush.msra.mxu0 0.0
    %547 = vmatpush.msra.mxu0 0.0
    %548 = vmatpush.msra.mxu0 0.0
    %549 = vmatpush.msra.mxu0 0.0
    %550 = vmatpush.msra.mxu0 0.0
    %551 = vmatpush.msra.mxu0 0.0
    %552 = vmatpush.msra.mxu0 %v438
    %553 = vmatmul.f32.gmra.mxu0 %v535
    %v554 = vpop.f32.mrf.mxu0
    %v555 = vadd.f32 0.0, %v554
    %556 = vdwg.mxu0
    %v557 = vadd.f32 %v405, %v532
    %v558 = vadd.f32 %v428, %v555
    %vm559 = vcmp.ge.s32.totalorder %v152, 12
    %vm560 = vcmp.lt.s32.totalorder %v152, 16
    %vm561 = vmand %vm559, %vm560
    %v562 = vsel %vm561, 1, 0
    %vm563 = vcmp.eq.s32.totalorder %v562, 1
    %v564 = vsel %vm563, %v139, 0.0
    %v565 = vsel %vm563, %v142, 0.0
    %v566 = vsel %vm563, %v163, 0.0
    %v567 = vsel %vm563, %v165, 0.0
    %v569 = vsel %vm114, %v564, 0
    %571 = vmatpush.xpose.msra.mxu0 0.0
    %572 = vmatpush.xpose.msra.mxu0 0.0
    %573 = vmatpush.xpose.msra.mxu0 0.0
    %574 = vmatpush.xpose.msra.mxu0 0.0
    %575 = vmatpush.xpose.msra.mxu0 0.0
    %576 = vmatpush.xpose.msra.mxu0 0.0
    %577 = vmatpush.xpose.msra.mxu0 0.0
    %578 = vmatpush.xpose.msra.mxu0 0.0
    %579 = vmatpush.xpose.msra.mxu0 0.0
    %580 = vmatpush.xpose.msra.mxu0 0.0
    %581 = vmatpush.xpose.msra.mxu0 0.0
    %582 = vmatpush.xpose.msra.mxu0 0.0
    %583 = vmatpush.xpose.msra.mxu0 0.0
    %584 = vmatpush.xpose.msra.mxu0 0.0
    %585 = vmatpush.xpose.msra.mxu0 0.0
    %586 = vmatpush.xpose.msra.mxu0 %v175
    %587 = vmatmul.f32.gmra.mxu0 %v569
    %v588 = vpop.f32.mrf.mxu0
    %v589 = vadd.f32 0.0, %v588
    %590 = vdwg.mxu0
    %v592 = vsel %vm114, %v565, 0
    %594 = vmatpush.xpose.msra.mxu0 0.0
    %595 = vmatpush.xpose.msra.mxu0 0.0
    %596 = vmatpush.xpose.msra.mxu0 0.0
    %597 = vmatpush.xpose.msra.mxu0 0.0
    %598 = vmatpush.xpose.msra.mxu0 0.0
    %599 = vmatpush.xpose.msra.mxu0 0.0
    %600 = vmatpush.xpose.msra.mxu0 0.0
    %601 = vmatpush.xpose.msra.mxu0 0.0
    %602 = vmatpush.xpose.msra.mxu0 0.0
    %603 = vmatpush.xpose.msra.mxu0 0.0
    %604 = vmatpush.xpose.msra.mxu0 0.0
    %605 = vmatpush.xpose.msra.mxu0 0.0
    %606 = vmatpush.xpose.msra.mxu0 0.0
    %607 = vmatpush.xpose.msra.mxu0 0.0
    %608 = vmatpush.xpose.msra.mxu0 0.0
    %609 = vmatpush.xpose.msra.mxu0 %v202
    %610 = vmatmul.f32.gmra.mxu0 %v592
    %v611 = vpop.f32.mrf.mxu0
    %v612 = vadd.f32 0.0, %v611
    %613 = vdwg.mxu0
    %v614 = vmul.f32 %v589, 0.5
    %v615 = vmul.f32 %v612, 0.5
    %v616 = vadd.f32 %v614, %v228
    %v617 = vadd.f32 %v615, %v229
    %v618 = vsel %vm234, %v616, -inf
    %619 = vmax.xlane.f32.xlu0 %v618
    %v620 = vpop.xlane.xlu0 %619
    %v621 = vsel %vm234, %v617, -inf
    %622 = vmax.xlane.f32.xlu0 %v621
    %v623 = vpop.xlane.xlu0 %622
    %v624 = vsub.f32 %v616, %v620
    %v625 = vsub.f32 %v617, %v623
    %v626 = vmul.f32 %v624, 1.442695
    %v627 = vpow.pop %v626
    %v628 = vmul.f32 %v625, 1.442695
    %v629 = vpow.pop %v628
    %v630 = vsel %vm234, %v627, 0.0
    %631 = vadd.xlane.f32.xlu0 %v630
    %v632 = vpop.xlane.xlu0 %631
    %v633 = vsel %vm234, %v629, 0.0
    %634 = vadd.xlane.f32.xlu0 %v633
    %v635 = vpop.xlane.xlu0 %634
    %v636 = vrcp.pop %v632
    %v637 = vrcp.pop %v635
    %v638 = vmul.f32 %v627, %v636
    %v639 = vmul.f32 %v629, %v637
    %v641 = vsel %vm234, %v638, 0
    %643 = vmatpush.msra.mxu0 0.0
    %644 = vmatpush.msra.mxu0 0.0
    %645 = vmatpush.msra.mxu0 0.0
    %646 = vmatpush.msra.mxu0 0.0
    %647 = vmatpush.msra.mxu0 0.0
    %648 = vmatpush.msra.mxu0 0.0
    %649 = vmatpush.msra.mxu0 0.0
    %650 = vmatpush.msra.mxu0 0.0
    %651 = vmatpush.msra.mxu0 0.0
    %652 = vmatpush.msra.mxu0 0.0
    %653 = vmatpush.msra.mxu0 0.0
    %654 = vmatpush.msra.mxu0 0.0
    %655 = vmatpush.msra.mxu0 0.0
    %656 = vmatpush.msra.mxu0 0.0
    %657 = vmatpush.msra.mxu0 0.0
    %658 = vmatpush.msra.mxu0 %v566
    %659 = vmatmul.f32.gmra.mxu0 %v641
    %v660 = vpop.f32.mrf.mxu0
    %v661 = vadd.f32 0.0, %v660
    %662 = vdwg.mxu0
    %v664 = vsel %vm234, %v639, 0
    %666 = vmatpush.msra.mxu0 0.0
    %667 = vmatpush.msra.mxu0 0.0
    %668 = vmatpush.msra.mxu0 0.0
    %669 = vmatpush.msra.mxu0 0.0
    %670 = vmatpush.msra.mxu0 0.0
    %671 = vmatpush.msra.mxu0 0.0
    %672 = vmatpush.msra.mxu0 0.0
    %673 = vmatpush.msra.mxu0 0.0
    %674 = vmatpush.msra.mxu0 0.0
    %675 = vmatpush.msra.mxu0 0.0
    %676 = vmatpush.msra.mxu0 0.0
    %677 = vmatpush.msra.mxu0 0.0
    %678 = vmatpush.msra.mxu0 0.0
    %679 = vmatpush.msra.mxu0 0.0
    %680 = vmatpush.msra.mxu0 0.0
    %681 = vmatpush.msra.mxu0 %v567
    %682 = vmatmul.f32.gmra.mxu0 %v664
    %v683 = vpop.f32.mrf.mxu0
    %v684 = vadd.f32 0.0, %v683
    %685 = vdwg.mxu0
    %v686 = vadd.f32 %v557, %v661
    %v687 = vadd.f32 %v558, %v684
    %vm688 = vcmp.ge.s32.totalorder %v152, 16
    %vm689 = vcmp.lt.s32.totalorder %v152, 20
    %vm690 = vmand %vm688, %vm689
    %v691 = vsel %vm690, 1, 0
    %vm692 = vcmp.eq.s32.totalorder %v691, 1
    %v693 = vsel %vm692, %v139, 0.0
    %v694 = vsel %vm692, %v142, 0.0
    %v695 = vsel %vm692, %v163, 0.0
    %v696 = vsel %vm692, %v165, 0.0
    %v698 = vsel %vm114, %v693, 0
    %700 = vmatpush.xpose.msra.mxu0 0.0
    %701 = vmatpush.xpose.msra.mxu0 0.0
    %702 = vmatpush.xpose.msra.mxu0 0.0
    %703 = vmatpush.xpose.msra.mxu0 0.0
    %704 = vmatpush.xpose.msra.mxu0 0.0
    %705 = vmatpush.xpose.msra.mxu0 0.0
    %706 = vmatpush.xpose.msra.mxu0 0.0
    %707 = vmatpush.xpose.msra.mxu0 0.0
    %708 = vmatpush.xpose.msra.mxu0 0.0
    %709 = vmatpush.xpose.msra.mxu0 0.0
    %710 = vmatpush.xpose.msra.mxu0 0.0
    %711 = vmatpush.xpose.msra.mxu0 0.0
    %712 = vmatpush.xpose.msra.mxu0 0.0
    %713 = vmatpush.xpose.msra.mxu0 0.0
    %714 = vmatpush.xpose.msra.mxu0 0.0
    %715 = vmatpush.xpose.msra.mxu0 %v175
    %716 = vmatmul.f32.gmra.mxu0 %v698
    %v717 = vpop.f32.mrf.mxu0
    %v718 = vadd.f32 0.0, %v717
    %719 = vdwg.mxu0
    %v721 = vsel %vm114, %v694, 0
    %723 = vmatpush.xpose.msra.mxu0 0.0
    %724 = vmatpush.xpose.msra.mxu0 0.0
    %725 = vmatpush.xpose.msra.mxu0 0.0
    %726 = vmatpush.xpose.msra.mxu0 0.0
    %727 = vmatpush.xpose.msra.mxu0 0.0
    %728 = vmatpush.xpose.msra.mxu0 0.0
    %729 = vmatpush.xpose.msra.mxu0 0.0
    %730 = vmatpush.xpose.msra.mxu0 0.0
    %731 = vmatpush.xpose.msra.mxu0 0.0
    %732 = vmatpush.xpose.msra.mxu0 0.0
    %733 = vmatpush.xpose.msra.mxu0 0.0
    %734 = vmatpush.xpose.msra.mxu0 0.0
    %735 = vmatpush.xpose.msra.mxu0 0.0
    %736 = vmatpush.xpose.msra.mxu0 0.0
    %737 = vmatpush.xpose.msra.mxu0 0.0
    %738 = vmatpush.xpose.msra.mxu0 %v202
    %739 = vmatmul.f32.gmra.mxu0 %v721
    %v740 = vpop.f32.mrf.mxu0
    %v741 = vadd.f32 0.0, %v740
    %742 = vdwg.mxu0
    %v743 = vmul.f32 %v718, 0.5
    %v744 = vmul.f32 %v741, 0.5
    %v745 = vadd.f32 %v743, %v228
    %v746 = vadd.f32 %v744, %v229
    %v747 = vsel %vm234, %v745, -inf
    %748 = vmax.xlane.f32.xlu0 %v747
    %v749 = vpop.xlane.xlu0 %748
    %v750 = vsel %vm234, %v746, -inf
    %751 = vmax.xlane.f32.xlu0 %v750
    %v752 = vpop.xlane.xlu0 %751
    %v753 = vsub.f32 %v745, %v749
    %v754 = vsub.f32 %v746, %v752
    %v755 = vmul.f32 %v753, 1.442695
    %v756 = vpow.pop %v755
    %v757 = vmul.f32 %v754, 1.442695
    %v758 = vpow.pop %v757
    %v759 = vsel %vm234, %v756, 0.0
    %760 = vadd.xlane.f32.xlu0 %v759
    %v761 = vpop.xlane.xlu0 %760
    %v762 = vsel %vm234, %v758, 0.0
    %763 = vadd.xlane.f32.xlu0 %v762
    %v764 = vpop.xlane.xlu0 %763
    %v765 = vrcp.pop %v761
    %v766 = vrcp.pop %v764
    %v767 = vmul.f32 %v756, %v765
    %v768 = vmul.f32 %v758, %v766
    %v770 = vsel %vm234, %v767, 0
    %772 = vmatpush.msra.mxu0 0.0
    %773 = vmatpush.msra.mxu0 0.0
    %774 = vmatpush.msra.mxu0 0.0
    %775 = vmatpush.msra.mxu0 0.0
    %776 = vmatpush.msra.mxu0 0.0
    %777 = vmatpush.msra.mxu0 0.0
    %778 = vmatpush.msra.mxu0 0.0
    %779 = vmatpush.msra.mxu0 0.0
    %780 = vmatpush.msra.mxu0 0.0
    %781 = vmatpush.msra.mxu0 0.0
    %782 = vmatpush.msra.mxu0 0.0
    %783 = vmatpush.msra.mxu0 0.0
    %784 = vmatpush.msra.mxu0 0.0
    %785 = vmatpush.msra.mxu0 0.0
    %786 = vmatpush.msra.mxu0 0.0
    %787 = vmatpush.msra.mxu0 %v695
    %788 = vmatmul.f32.gmra.mxu0 %v770
    %v789 = vpop.f32.mrf.mxu0
    %v790 = vadd.f32 0.0, %v789
    %791 = vdwg.mxu0
    %v793 = vsel %vm234, %v768, 0
    %795 = vmatpush.msra.mxu0 0.0
    %796 = vmatpush.msra.mxu0 0.0
    %797 = vmatpush.msra.mxu0 0.0
    %798 = vmatpush.msra.mxu0 0.0
    %799 = vmatpush.msra.mxu0 0.0
    %800 = vmatpush.msra.mxu0 0.0
    %801 = vmatpush.msra.mxu0 0.0
    %802 = vmatpush.msra.mxu0 0.0
    %803 = vmatpush.msra.mxu0 0.0
    %804 = vmatpush.msra.mxu0 0.0
    %805 = vmatpush.msra.mxu0 0.0
    %806 = vmatpush.msra.mxu0 0.0
    %807 = vmatpush.msra.mxu0 0.0
    %808 = vmatpush.msra.mxu0 0.0
    %809 = vmatpush.msra.mxu0 0.0
    %810 = vmatpush.msra.mxu0 %v696
    %811 = vmatmul.f32.gmra.mxu0 %v793
    %v812 = vpop.f32.mrf.mxu0
    %v813 = vadd.f32 0.0, %v812
    %814 = vdwg.mxu0
    %v815 = vadd.f32 %v686, %v790
    %v816 = vadd.f32 %v687, %v813
    %vm817 = vcmp.ge.s32.totalorder %v152, 20
    %vm818 = vcmp.lt.s32.totalorder %v152, 24
    %vm819 = vmand %vm817, %vm818
    %v820 = vsel %vm819, 1, 0
    %vm821 = vcmp.eq.s32.totalorder %v820, 1
    %v822 = vsel %vm821, %v139, 0.0
    %v823 = vsel %vm821, %v142, 0.0
    %v824 = vsel %vm821, %v163, 0.0
    %v825 = vsel %vm821, %v165, 0.0
    %v827 = vsel %vm114, %v822, 0
    %829 = vmatpush.xpose.msra.mxu0 0.0
    %830 = vmatpush.xpose.msra.mxu0 0.0
    %831 = vmatpush.xpose.msra.mxu0 0.0
    %832 = vmatpush.xpose.msra.mxu0 0.0
    %833 = vmatpush.xpose.msra.mxu0 0.0
    %834 = vmatpush.xpose.msra.mxu0 0.0
    %835 = vmatpush.xpose.msra.mxu0 0.0
    %836 = vmatpush.xpose.msra.mxu0 0.0
    %837 = vmatpush.xpose.msra.mxu0 0.0
    %838 = vmatpush.xpose.msra.mxu0 0.0
    %839 = vmatpush.xpose.msra.mxu0 0.0
    %840 = vmatpush.xpose.msra.mxu0 0.0
    %841 = vmatpush.xpose.msra.mxu0 0.0
    %842 = vmatpush.xpose.msra.mxu0 0.0
    %843 = vmatpush.xpose.msra.mxu0 0.0
    %844 = vmatpush.xpose.msra.mxu0 %v175
    %845 = vmatmul.f32.gmra.mxu0 %v827
    %v846 = vpop.f32.mrf.mxu0
    %v847 = vadd.f32 0.0, %v846
    %848 = vdwg.mxu0
    %v850 = vsel %vm114, %v823, 0
    %852 = vmatpush.xpose.msra.mxu0 0.0
    %853 = vmatpush.xpose.msra.mxu0 0.0
    %854 = vmatpush.xpose.msra.mxu0 0.0
    %855 = vmatpush.xpose.msra.mxu0 0.0
    %856 = vmatpush.xpose.msra.mxu0 0.0
    %857 = vmatpush.xpose.msra.mxu0 0.0
    %858 = vmatpush.xpose.msra.mxu0 0.0
    %859 = vmatpush.xpose.msra.mxu0 0.0
    %860 = vmatpush.xpose.msra.mxu0 0.0
    %861 = vmatpush.xpose.msra.mxu0 0.0
    %862 = vmatpush.xpose.msra.mxu0 0.0
    %863 = vmatpush.xpose.msra.mxu0 0.0
    %864 = vmatpush.xpose.msra.mxu0 0.0
    %865 = vmatpush.xpose.msra.mxu0 0.0
    %866 = vmatpush.xpose.msra.mxu0 0.0
    %867 = vmatpush.xpose.msra.mxu0 %v202
    %868 = vmatmul.f32.gmra.mxu0 %v850
    %v869 = vpop.f32.mrf.mxu0
    %v870 = vadd.f32 0.0, %v869
    %871 = vdwg.mxu0
    %v872 = vmul.f32 %v847, 0.5
    %v873 = vmul.f32 %v870, 0.5
    %v874 = vadd.f32 %v872, %v228
    %v875 = vadd.f32 %v873, %v229
    %v876 = vsel %vm234, %v874, -inf
    %877 = vmax.xlane.f32.xlu0 %v876
    %v878 = vpop.xlane.xlu0 %877
    %v879 = vsel %vm234, %v875, -inf
    %880 = vmax.xlane.f32.xlu0 %v879
    %v881 = vpop.xlane.xlu0 %880
    %v882 = vsub.f32 %v874, %v878
    %v883 = vsub.f32 %v875, %v881
    %v884 = vmul.f32 %v882, 1.442695
    %v885 = vpow.pop %v884
    %v886 = vmul.f32 %v883, 1.442695
    %v887 = vpow.pop %v886
    %v888 = vsel %vm234, %v885, 0.0
    %889 = vadd.xlane.f32.xlu0 %v888
    %v890 = vpop.xlane.xlu0 %889
    %v891 = vsel %vm234, %v887, 0.0
    %892 = vadd.xlane.f32.xlu0 %v891
    %v893 = vpop.xlane.xlu0 %892
    %v894 = vrcp.pop %v890
    %v895 = vrcp.pop %v893
    %v896 = vmul.f32 %v885, %v894
    %v897 = vmul.f32 %v887, %v895
    %v899 = vsel %vm234, %v896, 0
    %901 = vmatpush.msra.mxu0 0.0
    %902 = vmatpush.msra.mxu0 0.0
    %903 = vmatpush.msra.mxu0 0.0
    %904 = vmatpush.msra.mxu0 0.0
    %905 = vmatpush.msra.mxu0 0.0
    %906 = vmatpush.msra.mxu0 0.0
    %907 = vmatpush.msra.mxu0 0.0
    %908 = vmatpush.msra.mxu0 0.0
    %909 = vmatpush.msra.mxu0 0.0
    %910 = vmatpush.msra.mxu0 0.0
    %911 = vmatpush.msra.mxu0 0.0
    %912 = vmatpush.msra.mxu0 0.0
    %913 = vmatpush.msra.mxu0 0.0
    %914 = vmatpush.msra.mxu0 0.0
    %915 = vmatpush.msra.mxu0 0.0
    %916 = vmatpush.msra.mxu0 %v824
    %917 = vmatmul.f32.gmra.mxu0 %v899
    %v918 = vpop.f32.mrf.mxu0
    %v919 = vadd.f32 0.0, %v918
    %920 = vdwg.mxu0
    %v922 = vsel %vm234, %v897, 0
    %924 = vmatpush.msra.mxu0 0.0
    %925 = vmatpush.msra.mxu0 0.0
    %926 = vmatpush.msra.mxu0 0.0
    %927 = vmatpush.msra.mxu0 0.0
    %928 = vmatpush.msra.mxu0 0.0
    %929 = vmatpush.msra.mxu0 0.0
    %930 = vmatpush.msra.mxu0 0.0
    %931 = vmatpush.msra.mxu0 0.0
    %932 = vmatpush.msra.mxu0 0.0
    %933 = vmatpush.msra.mxu0 0.0
    %934 = vmatpush.msra.mxu0 0.0
    %935 = vmatpush.msra.mxu0 0.0
    %936 = vmatpush.msra.mxu0 0.0
    %937 = vmatpush.msra.mxu0 0.0
    %938 = vmatpush.msra.mxu0 0.0
    %939 = vmatpush.msra.mxu0 %v825
    %940 = vmatmul.f32.gmra.mxu0 %v922
    %v941 = vpop.f32.mrf.mxu0
    %v942 = vadd.f32 0.0, %v941
    %943 = vdwg.mxu0
    %v944 = vadd.f32 %v815, %v919
    %v945 = vadd.f32 %v816, %v942
    %vm946 = vcmp.ge.s32.totalorder %v152, 24
    %vm947 = vcmp.lt.s32.totalorder %v152, 28
    %vm948 = vmand %vm946, %vm947
    %v949 = vsel %vm948, 1, 0
    %vm950 = vcmp.eq.s32.totalorder %v949, 1
    %v951 = vsel %vm950, %v139, 0.0
    %v952 = vsel %vm950, %v142, 0.0
    %v953 = vsel %vm950, %v163, 0.0
    %v954 = vsel %vm950, %v165, 0.0
    %v956 = vsel %vm114, %v951, 0
    %958 = vmatpush.xpose.msra.mxu0 0.0
    %959 = vmatpush.xpose.msra.mxu0 0.0
    %960 = vmatpush.xpose.msra.mxu0 0.0
    %961 = vmatpush.xpose.msra.mxu0 0.0
    %962 = vmatpush.xpose.msra.mxu0 0.0
    %963 = vmatpush.xpose.msra.mxu0 0.0
    %964 = vmatpush.xpose.msra.mxu0 0.0
    %965 = vmatpush.xpose.msra.mxu0 0.0
    %966 = vmatpush.xpose.msra.mxu0 0.0
    %967 = vmatpush.xpose.msra.mxu0 0.0
    %968 = vmatpush.xpose.msra.mxu0 0.0
    %969 = vmatpush.xpose.msra.mxu0 0.0
    %970 = vmatpush.xpose.msra.mxu0 0.0
    %971 = vmatpush.xpose.msra.mxu0 0.0
    %972 = vmatpush.xpose.msra.mxu0 0.0
    %973 = vmatpush.xpose.msra.mxu0 %v175
    %974 = vmatmul.f32.gmra.mxu0 %v956
    %v975 = vpop.f32.mrf.mxu0
    %v976 = vadd.f32 0.0, %v975
    %977 = vdwg.mxu0
    %v979 = vsel %vm114, %v952, 0
    %981 = vmatpush.xpose.msra.mxu0 0.0
    %982 = vmatpush.xpose.msra.mxu0 0.0
    %983 = vmatpush.xpose.msra.mxu0 0.0
    %984 = vmatpush.xpose.msra.mxu0 0.0
    %985 = vmatpush.xpose.msra.mxu0 0.0
    %986 = vmatpush.xpose.msra.mxu0 0.0
    %987 = vmatpush.xpose.msra.mxu0 0.0
    %988 = vmatpush.xpose.msra.mxu0 0.0
    %989 = vmatpush.xpose.msra.mxu0 0.0
    %990 = vmatpush.xpose.msra.mxu0 0.0
    %991 = vmatpush.xpose.msra.mxu0 0.0
    %992 = vmatpush.xpose.msra.mxu0 0.0
    %993 = vmatpush.xpose.msra.mxu0 0.0
    %994 = vmatpush.xpose.msra.mxu0 0.0
    %995 = vmatpush.xpose.msra.mxu0 0.0
    %996 = vmatpush.xpose.msra.mxu0 %v202
    %997 = vmatmul.f32.gmra.mxu0 %v979
    %v998 = vpop.f32.mrf.mxu0
    %v999 = vadd.f32 0.0, %v998
    %1000 = vdwg.mxu0
    %v1001 = vmul.f32 %v976, 0.5
    %v1002 = vmul.f32 %v999, 0.5
    %v1003 = vadd.f32 %v1001, %v228
    %v1004 = vadd.f32 %v1002, %v229
    %v1005 = vsel %vm234, %v1003, -inf
    %1006 = vmax.xlane.f32.xlu0 %v1005
    %v1007 = vpop.xlane.xlu0 %1006
    %v1008 = vsel %vm234, %v1004, -inf
    %1009 = vmax.xlane.f32.xlu0 %v1008
    %v1010 = vpop.xlane.xlu0 %1009
    %v1011 = vsub.f32 %v1003, %v1007
    %v1012 = vsub.f32 %v1004, %v1010
    %v1013 = vmul.f32 %v1011, 1.442695
    %v1014 = vpow.pop %v1013
    %v1015 = vmul.f32 %v1012, 1.442695
    %v1016 = vpow.pop %v1015
    %v1017 = vsel %vm234, %v1014, 0.0
    %1018 = vadd.xlane.f32.xlu0 %v1017
    %v1019 = vpop.xlane.xlu0 %1018
    %v1020 = vsel %vm234, %v1016, 0.0
    %1021 = vadd.xlane.f32.xlu0 %v1020
    %v1022 = vpop.xlane.xlu0 %1021
    %v1023 = vrcp.pop %v1019
    %v1024 = vrcp.pop %v1022
    %v1025 = vmul.f32 %v1014, %v1023
    %v1026 = vmul.f32 %v1016, %v1024
    %v1028 = vsel %vm234, %v1025, 0
    %1030 = vmatpush.msra.mxu0 0.0
    %1031 = vmatpush.msra.mxu0 0.0
    %1032 = vmatpush.msra.mxu0 0.0
    %1033 = vmatpush.msra.mxu0 0.0
    %1034 = vmatpush.msra.mxu0 0.0
    %1035 = vmatpush.msra.mxu0 0.0
    %1036 = vmatpush.msra.mxu0 0.0
    %1037 = vmatpush.msra.mxu0 0.0
    %1038 = vmatpush.msra.mxu0 0.0
    %1039 = vmatpush.msra.mxu0 0.0
    %1040 = vmatpush.msra.mxu0 0.0
    %1041 = vmatpush.msra.mxu0 0.0
    %1042 = vmatpush.msra.mxu0 0.0
    %1043 = vmatpush.msra.mxu0 0.0
    %1044 = vmatpush.msra.mxu0 0.0
    %1045 = vmatpush.msra.mxu0 %v953
    %1046 = vmatmul.f32.gmra.mxu0 %v1028
    %v1047 = vpop.f32.mrf.mxu0
    %v1048 = vadd.f32 0.0, %v1047
    %1049 = vdwg.mxu0
    %v1051 = vsel %vm234, %v1026, 0
    %1053 = vmatpush.msra.mxu0 0.0
    %1054 = vmatpush.msra.mxu0 0.0
    %1055 = vmatpush.msra.mxu0 0.0
    %1056 = vmatpush.msra.mxu0 0.0
    %1057 = vmatpush.msra.mxu0 0.0
    %1058 = vmatpush.msra.mxu0 0.0
    %1059 = vmatpush.msra.mxu0 0.0
    %1060 = vmatpush.msra.mxu0 0.0
    %1061 = vmatpush.msra.mxu0 0.0
    %1062 = vmatpush.msra.mxu0 0.0
    %1063 = vmatpush.msra.mxu0 0.0
    %1064 = vmatpush.msra.mxu0 0.0
    %1065 = vmatpush.msra.mxu0 0.0
    %1066 = vmatpush.msra.mxu0 0.0
    %1067 = vmatpush.msra.mxu0 0.0
    %1068 = vmatpush.msra.mxu0 %v954
    %1069 = vmatmul.f32.gmra.mxu0 %v1051
    %v1070 = vpop.f32.mrf.mxu0
    %v1071 = vadd.f32 0.0, %v1070
    %1072 = vdwg.mxu0
    %v1073 = vadd.f32 %v944, %v1048
    %v1074 = vadd.f32 %v945, %v1071
    %vm1075 = vcmp.ge.s32.totalorder %v152, 28
    %vm1076 = vcmp.lt.s32.totalorder %v152, 32
    %vm1077 = vmand %vm1075, %vm1076
    %v1078 = vsel %vm1077, 1, 0
    %vm1079 = vcmp.eq.s32.totalorder %v1078, 1
    %v1080 = vsel %vm1079, %v139, 0.0
    %v1081 = vsel %vm1079, %v142, 0.0
    %v1082 = vsel %vm1079, %v163, 0.0
    %v1083 = vsel %vm1079, %v165, 0.0
    %v1085 = vsel %vm114, %v1080, 0
    %1087 = vmatpush.xpose.msra.mxu0 0.0
    %1088 = vmatpush.xpose.msra.mxu0 0.0
    %1089 = vmatpush.xpose.msra.mxu0 0.0
    %1090 = vmatpush.xpose.msra.mxu0 0.0
    %1091 = vmatpush.xpose.msra.mxu0 0.0
    %1092 = vmatpush.xpose.msra.mxu0 0.0
    %1093 = vmatpush.xpose.msra.mxu0 0.0
    %1094 = vmatpush.xpose.msra.mxu0 0.0
    %1095 = vmatpush.xpose.msra.mxu0 0.0
    %1096 = vmatpush.xpose.msra.mxu0 0.0
    %1097 = vmatpush.xpose.msra.mxu0 0.0
    %1098 = vmatpush.xpose.msra.mxu0 0.0
    %1099 = vmatpush.xpose.msra.mxu0 0.0
    %1100 = vmatpush.xpose.msra.mxu0 0.0
    %1101 = vmatpush.xpose.msra.mxu0 0.0
    %1102 = vmatpush.xpose.msra.mxu0 %v175
    %1103 = vmatmul.f32.gmra.mxu0 %v1085
    %v1104 = vpop.f32.mrf.mxu0
    %v1105 = vadd.f32 0.0, %v1104
    %1106 = vdwg.mxu0
    %v1108 = vsel %vm114, %v1081, 0
    %1110 = vmatpush.xpose.msra.mxu0 0.0
    %1111 = vmatpush.xpose.msra.mxu0 0.0
    %1112 = vmatpush.xpose.msra.mxu0 0.0
    %1113 = vmatpush.xpose.msra.mxu0 0.0
    %1114 = vmatpush.xpose.msra.mxu0 0.0
    %1115 = vmatpush.xpose.msra.mxu0 0.0
    %1116 = vmatpush.xpose.msra.mxu0 0.0
    %1117 = vmatpush.xpose.msra.mxu0 0.0
    %1118 = vmatpush.xpose.msra.mxu0 0.0
    %1119 = vmatpush.xpose.msra.mxu0 0.0
    %1120 = vmatpush.xpose.msra.mxu0 0.0
    %1121 = vmatpush.xpose.msra.mxu0 0.0
    %1122 = vmatpush.xpose.msra.mxu0 0.0
    %1123 = vmatpush.xpose.msra.mxu0 0.0
    %1124 = vmatpush.xpose.msra.mxu0 0.0
    %1125 = vmatpush.xpose.msra.mxu0 %v202
    %1126 = vmatmul.f32.gmra.mxu0 %v1108
    %v1127 = vpop.f32.mrf.mxu0
    %v1128 = vadd.f32 0.0, %v1127
    %1129 = vdwg.mxu0
    %v1130 = vmul.f32 %v1105, 0.5
    %v1131 = vmul.f32 %v1128, 0.5
    %v1132 = vadd.f32 %v1130, %v228
    %v1133 = vadd.f32 %v1131, %v229
    %v1134 = vsel %vm234, %v1132, -inf
    %1135 = vmax.xlane.f32.xlu0 %v1134
    %v1136 = vpop.xlane.xlu0 %1135
    %v1137 = vsel %vm234, %v1133, -inf
    %1138 = vmax.xlane.f32.xlu0 %v1137
    %v1139 = vpop.xlane.xlu0 %1138
    %v1140 = vsub.f32 %v1132, %v1136
    %v1141 = vsub.f32 %v1133, %v1139
    %v1142 = vmul.f32 %v1140, 1.442695
    %v1143 = vpow.pop %v1142
    %v1144 = vmul.f32 %v1141, 1.442695
    %v1145 = vpow.pop %v1144
    %v1146 = vsel %vm234, %v1143, 0.0
    %1147 = vadd.xlane.f32.xlu0 %v1146
    %v1148 = vpop.xlane.xlu0 %1147
    %v1149 = vsel %vm234, %v1145, 0.0
    %1150 = vadd.xlane.f32.xlu0 %v1149
    %v1151 = vpop.xlane.xlu0 %1150
    %v1152 = vrcp.pop %v1148
    %v1153 = vrcp.pop %v1151
    %v1154 = vmul.f32 %v1143, %v1152
    %v1155 = vmul.f32 %v1145, %v1153
    %v1157 = vsel %vm234, %v1154, 0
    %1159 = vmatpush.msra.mxu0 0.0
    %1160 = vmatpush.msra.mxu0 0.0
    %1161 = vmatpush.msra.mxu0 0.0
    %1162 = vmatpush.msra.mxu0 0.0
    %1163 = vmatpush.msra.mxu0 0.0
    %1164 = vmatpush.msra.mxu0 0.0
    %1165 = vmatpush.msra.mxu0 0.0
    %1166 = vmatpush.msra.mxu0 0.0
    %1167 = vmatpush.msra.mxu0 0.0
    %1168 = vmatpush.msra.mxu0 0.0
    %1169 = vmatpush.msra.mxu0 0.0
    %1170 = vmatpush.msra.mxu0 0.0
    %1171 = vmatpush.msra.mxu0 0.0
    %1172 = vmatpush.msra.mxu0 0.0
    %1173 = vmatpush.msra.mxu0 0.0
    %1174 = vmatpush.msra.mxu0 %v1082
    %1175 = vmatmul.f32.gmra.mxu0 %v1157
    %v1176 = vpop.f32.mrf.mxu0
    %v1177 = vadd.f32 0.0, %v1176
    %1178 = vdwg.mxu0
    %v1180 = vsel %vm234, %v1155, 0
    %1182 = vmatpush.msra.mxu0 0.0
    %1183 = vmatpush.msra.mxu0 0.0
    %1184 = vmatpush.msra.mxu0 0.0
    %1185 = vmatpush.msra.mxu0 0.0
    %1186 = vmatpush.msra.mxu0 0.0
    %1187 = vmatpush.msra.mxu0 0.0
    %1188 = vmatpush.msra.mxu0 0.0
    %1189 = vmatpush.msra.mxu0 0.0
    %1190 = vmatpush.msra.mxu0 0.0
    %1191 = vmatpush.msra.mxu0 0.0
    %1192 = vmatpush.msra.mxu0 0.0
    %1193 = vmatpush.msra.mxu0 0.0
    %1194 = vmatpush.msra.mxu0 0.0
    %1195 = vmatpush.msra.mxu0 0.0
    %1196 = vmatpush.msra.mxu0 0.0
    %1197 = vmatpush.msra.mxu0 %v1083
    %1198 = vmatmul.f32.gmra.mxu0 %v1180
    %v1199 = vpop.f32.mrf.mxu0
    %v1200 = vadd.f32 0.0, %v1199
    %1201 = vdwg.mxu0
    %v1202 = vadd.f32 %v1073, %v1177
    %v1203 = vadd.f32 %v1074, %v1200
    %v1204 = vld [vmem:[#allocation8] sm:$0xff]
    %v1205 = vld [vmem:[#allocation8 + $0x8] sm:$0xff]
    %v1206 = vld [vmem:[#allocation8 + $0x10] sm:$0xff]
    %v1207 = vld [vmem:[#allocation8 + $0x18] sm:$0xff]
    %v1208 = vld [vmem:[%s5] sm:$0x1]
    %v1210 = vperm.slane %v1208, 0
    %v1213 = vsel %vm114, %v1202, 0
    %v1216 = vsel %vm114, %v1203, 0
    %1218 = vmatpush.msra.mxu0 0.0
    %1219 = vmatpush.msra.mxu0 0.0
    %1220 = vmatpush.msra.mxu0 0.0
    %1221 = vmatpush.msra.mxu0 0.0
    %1222 = vmatpush.msra.mxu0 0.0
    %1223 = vmatpush.msra.mxu0 0.0
    %1224 = vmatpush.msra.mxu0 0.0
    %1225 = vmatpush.msra.mxu0 0.0
    %1226 = vmatpush.msra.mxu0 0.0
    %1227 = vmatpush.msra.mxu0 0.0
    %1228 = vmatpush.msra.mxu0 0.0
    %1229 = vmatpush.msra.mxu0 0.0
    %1230 = vmatpush.msra.mxu0 %v1207
    %1231 = vmatpush.msra.mxu0 %v1206
    %1232 = vmatpush.msra.mxu0 %v1205
    %1233 = vmatpush.msra.mxu0 %v1204
    %1234 = vmatmul.f32.gmra.mxu0 %v1213
    %v1235 = vpop.f32.mrf.mxu0
    %v1236 = vadd.f32 %v1210, %v1235
    %1237 = vmatmul.f32.gmra.mxu0 %v1216
    %v1238 = vpop.f32.mrf.mxu0
    %v1239 = vadd.f32 %v1210, %v1238
    %1240 = vdwg.mxu0
    %v1241 = vld [vmem:[#allocation9] sm:$0xff]
    %v1242 = vld [vmem:[#allocation9 + $0x8] sm:$0xff]
    %v1243 = vld [vmem:[#allocation9 + $0x10] sm:$0xff]
    %v1244 = vld [vmem:[#allocation9 + $0x18] sm:$0xff]
    %v1245 = vld [vmem:[%s7] sm:$0x1]
    %v1247 = vperm.slane %v1245, 0
    %v1250 = vsel %vm114, %v1236, 0
    %v1253 = vsel %vm114, %v1239, 0
    %1255 = vmatpush.msra.mxu0 0.0
    %1256 = vmatpush.msra.mxu0 0.0
    %1257 = vmatpush.msra.mxu0 0.0
    %1258 = vmatpush.msra.mxu0 0.0
    %1259 = vmatpush.msra.mxu0 0.0
    %1260 = vmatpush.msra.mxu0 0.0
    %1261 = vmatpush.msra.mxu0 0.0
    %1262 = vmatpush.msra.mxu0 0.0
    %1263 = vmatpush.msra.mxu0 0.0
    %1264 = vmatpush.msra.mxu0 0.0
    %1265 = vmatpush.msra.mxu0 0.0
    %1266 = vmatpush.msra.mxu0 0.0
    %1267 = vmatpush.msra.mxu0 %v1244
    %1268 = vmatpush.msra.mxu0 %v1243
    %1269 = vmatpush.msra.mxu0 %v1242
    %1270 = vmatpush.msra.mxu0 %v1241
    %1271 = vmatmul.f32.gmra.mxu0 %v1250
    %v1272 = vpop.f32.mrf.mxu0
    %v1273 = vadd.f32 %v1247, %v1272
    %1274 = vmatmul.f32.gmra.mxu0 %v1253
    %v1275 = vpop.f32.mrf.mxu0
    %v1276 = vadd.f32 %v1247, %v1275
    %1277 = vdwg.mxu0
    %v1278 = vtanh.pop %v1273
    %v1279 = vtanh.pop %v1276
    %v1280 = vld [vmem:[%s8] sm:$0x1]
    %v1282 = vperm.slane %v1280, 0
    %v1284 = vmul.f32 %v1278, %v1282
    %v1285 = vmul.f32 %v1279, %v1282
    %1286 = vadd.xlane.f32.xlu0 %v1284
    %v1287 = vpop.xlane.xlu0 %1286
    %1288 = vadd.xlane.f32.xlu0 %v1285
    %v1289 = vpop.xlane.xlu0 %1288
    %s1290 = sld [smem:[#allocation2]]
    %v1291 = vstv %s1290
    %v1292 = vadd.f32 %v1287, %v1291
    %v1293 = vadd.f32 %v1289, %v1291
    %v1294 = vsub.f32 0.0, %v1292
    %v1295 = vsub.f32 0.0, %v1293
    %v1296 = vmul.f32 %v1294, 1.442695
    %v1297 = vpow.pop %v1296
    %v1298 = vmul.f32 %v1295, 1.442695
    %v1299 = vpow.pop %v1298
    %v1300 = vadd.f32 %v1297, 1.0
    %v1301 = vadd.f32 %v1299, 1.0
    %v1302 = vrcp.pop %v1300
    %v1303 = vrcp.pop %v1301
    %v1304 = vperm.slane %v105, 0
    %v1305 = vlaneseq
    %v1306 = vshrl.u32 %v1305, 7
    %1308 = vset.pattern.permute.xlu0 %v1306
    %1309 = vperm.xlu0 %1308, %v1304
    %v1310 = vpop.permute.xlu0 %1309
    %v1311 = vperm.slane %v105, 1
    %v1312 = vlaneseq
    %v1313 = vshrl.u32 %v1312, 7
    %1315 = vset.pattern.permute.xlu0 %v1313
    %1316 = vperm.xlu0 %1315, %v1311
    %v1317 = vpop.permute.xlu0 %1316
    %v1320 = vmul.f32 %v1302, %v1310
    %v1321 = vmul.f32 %v1303, %v1317
    %1324 = vset.pattern.permute.xlu0 0
    %1325 = vperm.xlu0 %1324, %v1320
    %v1326 = vpop.permute.xlu0 %1325
    %1327 = vset.pattern.permute.xlu0 0
    %1328 = vperm.xlu0 %1327, %v1321
    %v1329 = vpop.permute.xlu0 %1328
    %v1330 = vperm.slane %v1326, %v152
    %v1331 = vperm.slane %v1329, %v152
    %vm1332 = vcmask 1041409
    %v1333 = vsel %vm1332, %v1331, %v1330
    %vm1335 = vcmask 58368
    %v1336 = vsel %vm1335, %v1333, 0.0
    %1337 = vadd.xlane.f32.xlu0 %v1336
    %v1338 = vpop.xlane.xlu0 %1337
    %v1339 = vadd.f32 %v1338, 1e-09
    %v1340 = vrcp.pop %v1339
    %v1342 = vperm.slane %v1340, 0
    %v1343 = vperm.slane %v1340, 1
    %v1346 = vmul.f32 %v1320, %v1342
    %v1347 = vmul.f32 %v1321, %v1343
    %1349 = vset.pattern.permute.xlu0 0
    %1350 = vperm.xlu0 %1349, %v1346
    %v1351 = vpop.permute.xlu0 %1350
    %v1352 = vperm.slane %v1351, %v152
    %v1353 = vsel %vm234, %v1352, 0
    %1355 = vmatpush.msra.mxu0 0.0
    %1356 = vmatpush.msra.mxu0 0.0
    %1357 = vmatpush.msra.mxu0 0.0
    %1358 = vmatpush.msra.mxu0 0.0
    %1359 = vmatpush.msra.mxu0 0.0
    %1360 = vmatpush.msra.mxu0 0.0
    %1361 = vmatpush.msra.mxu0 0.0
    %1362 = vmatpush.msra.mxu0 0.0
    %1363 = vmatpush.msra.mxu0 0.0
    %1364 = vmatpush.msra.mxu0 0.0
    %1365 = vmatpush.msra.mxu0 0.0
    %1366 = vmatpush.msra.mxu0 0.0
    %1367 = vmatpush.msra.mxu0 0.0
    %1368 = vmatpush.msra.mxu0 0.0
    %1369 = vmatpush.msra.mxu0 0.0
    %1370 = vmatpush.msra.mxu0 %v1236
    %1371 = vmatmul.f32.gmra.mxu0 %v1353
    %v1372 = vpop.f32.mrf.mxu0
    %v1373 = vadd.f32 0.0, %v1372
    %1374 = vdwg.mxu0
    %1376 = vset.pattern.permute.xlu0 0
    %1377 = vperm.xlu0 %1376, %v1347
    %v1378 = vpop.permute.xlu0 %1377
    %v1379 = vperm.slane %v1378, %v152
    %v1380 = vsel %vm234, %v1379, 0
    %1382 = vmatpush.msra.mxu0 0.0
    %1383 = vmatpush.msra.mxu0 0.0
    %1384 = vmatpush.msra.mxu0 0.0
    %1385 = vmatpush.msra.mxu0 0.0
    %1386 = vmatpush.msra.mxu0 0.0
    %1387 = vmatpush.msra.mxu0 0.0
    %1388 = vmatpush.msra.mxu0 0.0
    %1389 = vmatpush.msra.mxu0 0.0
    %1390 = vmatpush.msra.mxu0 0.0
    %1391 = vmatpush.msra.mxu0 0.0
    %1392 = vmatpush.msra.mxu0 0.0
    %1393 = vmatpush.msra.mxu0 0.0
    %1394 = vmatpush.msra.mxu0 0.0
    %1395 = vmatpush.msra.mxu0 0.0
    %1396 = vmatpush.msra.mxu0 0.0
    %1397 = vmatpush.msra.mxu0 %v1239
    %1398 = vmatmul.f32.gmra.mxu0 %v1380
    %v1399 = vpop.f32.mrf.mxu0
    %v1400 = vadd.f32 0.0, %v1399
    %1401 = vdwg.mxu0
    %v1404 = vrot.slane %v1400, 7
    %v1405 = vsel %vm1332, %v1404, %v1373
    %vm1407 = vcmask 254976
    %1408 = vst.msk [vmem:[#allocation11] sm:$0x3] %vm1407, %v1405
    %v1409 = vsel %vm1332, %v1379, %v1352
    %1411 = vst.msk [vmem:[#allocation12] sm:$0x3] %vm1335, %v1409
    // Predicated region
    $region58: #{tpu_custom_call.1} parent=1 // pred_check
      _
    $region59: #{tpu_custom_call.1} parent=1 // pred_check_branch
      %1413 = sbr.rel (0) target = $region61
    $region60: #{tpu_custom_call.1} parent=1 // pred_region
      %1415 = vsyncadd [#allocation5], 0
      %s1417 = sshll.u32 [#allocation11], 4
      %s1418 = int_to_ptr.vmem [resolvable:$true] %s1417
      %s1419 = sshll.u32 %s10, 4
      %s1420 = int_to_ptr.hbm [resolvable:$true] %s1419
      %1422 = dma.vmem_to_hbm [thread:$0]  %s1418, 32, %s1420, [#allocation5]
    $region61: #{tpu_custom_call.1} parent=1 // pred_fallthru
      _
    // Predicated region
    $region62: #{tpu_custom_call.1} parent=1 // pred_check
      _
    $region63: #{tpu_custom_call.1} parent=1 // pred_check_branch
      %1424 = sbr.rel (0) target = $region65
    $region64: #{tpu_custom_call.1} parent=1 // pred_region
      %1426 = vsyncadd [#allocation13], 0
      %s1428 = sshll.u32 [#allocation12], 4
      %s1429 = int_to_ptr.vmem [resolvable:$true] %s1428
      %s1430 = sshll.u32 %s11, 4
      %s1431 = int_to_ptr.hbm [resolvable:$true] %s1430
      %1433 = dma.vmem_to_hbm [thread:$0]  %s1429, 32, %s1431, [#allocation13]
    $region65: #{tpu_custom_call.1} parent=1 // pred_fallthru
      _
    // Predicated region
    $region66: #{tpu_custom_call.1} parent=1 // pred_check
      _
    $region67: #{tpu_custom_call.1} parent=1 // pred_check_branch
      %1435 = sbr.rel (0) target = $region69
    $region68: #{tpu_custom_call.1} parent=1 // pred_region
      %1437 = dma.done [#allocation5], 32
    $region69: #{tpu_custom_call.1} parent=1 // pred_fallthru
      _
    // Predicated region
    $region70: #{tpu_custom_call.1} parent=1 // pred_check
      _
    $region71: #{tpu_custom_call.1} parent=1 // pred_check_branch
      %1439 = sbr.rel (0) target = $region73
    $region72: #{tpu_custom_call.1} parent=1 // pred_region
      %1441 = dma.done [#allocation13], 32
    $region73: #{tpu_custom_call.1} parent=1 // pred_fallthru
      _
    %1442 = vsyncpa [#allocation4], 1
    %1443 = vsyncpa [#allocation7], 1
    %1444 = vsyncpa [#allocation10], 1
    %1445 = vsyncpa [#allocation5], 1
    %1446 = vsyncpa [#allocation13], 1

</llo_original>
